<compile_context>
chip_gen: v5e
topology: v5e:2x2
jax: 0.10.0
libtpu: 0.0.40
codegen_flags: <defaults>
</compile_context>

<pallas_src>
import functools

import jax
import jax.numpy as jnp
from jax.experimental import pallas as pl
from jax.experimental.pallas import tpu as pltpu


def _round_up(x, m):
    return (x + m - 1) // m * m


def _vmem_capacity_bytes():
    """Per-core VMEM capacity, with a conservative (v7x) fallback."""
    try:
        info = pltpu.get_tpu_info()
        cap = getattr(info, "vmem_capacity_bytes", None)
        if cap:
            return int(cap)
    except Exception:
        pass
    return 64 << 20


def _mlp_kernel(num_layers, out_pads, *refs):
    """Fused MLP for one batch tile: (Linear -> ReLU) * (L-1) -> Linear.

    refs = [x_ref, w_0, ..., w_{L-1}, b_packed_ref, out_ref]
      x_ref:        (TB, D)               bf16 (D unpadded)
      w_i:          (in_pad_i, out_pad_i) bf16, (in, out) layout
      b_packed_ref: (L, max_out_pad)      f32, row i = bias of layer i
      out_ref:      (TB, C_pad)           f32 (lane-dense)
    """
    x_ref = refs[0]
    w_refs = refs[1:1 + num_layers]
    b_ref = refs[1 + num_layers]
    out_ref = refs[-1]

    h = x_ref[...]                                       # bf16 activations
    for i in range(num_layers):
        acc = jnp.dot(h, w_refs[i][...],                 # bf16 x bf16 -> f32 MXU
                      preferred_element_type=jnp.float32)
        acc = acc + b_ref[i:i + 1, :out_pads[i]]         # f32 bias, static slice
        if i < num_layers - 1:
            h = jnp.maximum(acc, 0.0).astype(jnp.bfloat16)  # ReLU, bf16 for next MXU pass
        else:
            out_ref[...] = acc.astype(out_ref.dtype)


def prepare_mlp_params(weights, biases, *, feature_align=128):
    """One-time packing: pad weights to lane-dense bf16, pack biases (f32).

    feature_align=128 keeps every tile lane-dense on all generations; use 256
    for >=128-wide hidden dims when MXU-bound on v6e/v7x (256x256 MXUs).
    """
    assert len(weights) == len(biases)
    num_layers = len(weights)
    D = weights[0].shape[0]
    feat_dims = [D] + [w.shape[1] for w in weights]
    for i, w in enumerate(weights):
        assert w.shape[0] == feat_dims[i], "weight in-dim mismatch"

    # pads[0] is the *unpadded* input dim (no host-side x padding / HBM round trip).
    pads = [D] + [_round_up(d, feature_align) for d in feat_dims[1:]]

    w_ps = []
    for i, w in enumerate(weights):
        wp = jnp.zeros((pads[i], pads[i + 1]), jnp.bfloat16)
        w_ps.append(wp.at[:w.shape[0], :w.shape[1]].set(w.astype(jnp.bfloat16)))

    max_out_p = max(pads[1:])
    b_packed = jnp.zeros((num_layers, max_out_p), jnp.float32)
    for i, b in enumerate(biases):
        b_row = jnp.reshape(b.astype(jnp.float32), (-1,))
        b_packed = b_packed.at[i, :b_row.shape[0]].set(b_row)

    return dict(weights=w_ps, biases=b_packed, feat_dims=feat_dims, pads=pads)


def mlp_forward(x, prepared, *, block_b=512):
    """Run the fused MLP Pallas kernel.

    Args:
      x:        (B, D) float input (cast to bf16 at the boundary).
      prepared: output of prepare_mlp_params.
      block_b:  max batch-tile rows per grid step.
    Returns:
      (B, C) float32 logits.
    """
    w_ps = prepared["weights"]
    b_packed = prepared["biases"]
    feat_dims = prepared["feat_dims"]
    pads = prepared["pads"]
    num_layers = len(w_ps)

    B, D = x.shape
    assert D == feat_dims[0], "input feature dim mismatch"
    C = feat_dims[-1]
    Cp = pads[-1]

    # ---- batch tiling: bf16 sublane packing (16 rows); keep >=2 grid steps
    # so the "parallel" batch axis can shard across v7x's two TensorCores.
    TB = min(block_b, _round_up(B, 16))
    if _round_up(B, TB) // TB < 2 and B > 16:
        TB = max(16, _round_up(pl.cdiv(B, 2), 16))
    Bp = _round_up(B, TB)
    grid = (Bp // TB,)

    x_p = x.astype(jnp.bfloat16)
    if Bp != B:
        x_p = jnp.zeros((Bp, D), jnp.bfloat16).at[:B].set(x_p)

    # ---- VMEM budget / scale-up guard ------------------------------------
    vmem_cap = _vmem_capacity_bytes()
    weight_bytes = sum(int(w.size) * 2 for w in w_ps)          # bf16
    bias_bytes = int(b_packed.size) * 4
    assert weight_bytes + bias_bytes < vmem_cap // 2, (
        "resident-weight design exceeds the per-core VMEM budget; "
        "see TODO(synk) at top of file (K-tiled reduction grid needed)")

    def run(single_buffer_weights):
        resident_kw = (dict(pipeline_mode=pl.Buffered(1))
                       if single_buffer_weights else {})
        in_specs = [pl.BlockSpec((TB, D), lambda b: (b, 0))]        # batch-tiled activations
        for i in range(num_layers):                                 # VMEM-resident weights
            in_specs.append(pl.BlockSpec(w_ps[i].shape, lambda b: (0, 0), **resident_kw))
        in_specs.append(pl.BlockSpec(b_packed.shape, lambda b: (0, 0), **resident_kw))
        out_spec = pl.BlockSpec((TB, Cp), lambda b: (b, 0))         # lane-dense output tile

        matmul_flops = 2 * Bp * sum(int(w.shape[0]) * int(w.shape[1]) for w in w_ps)
        bytes_accessed = (2 * int(x_p.size) + 2 * sum(int(w.size) for w in w_ps)
                          + 4 * int(b_packed.size) + 4 * Bp * Cp)
        cost = pl.CostEstimate(flops=int(matmul_flops), transcendentals=0,
                               bytes_accessed=int(bytes_accessed))

        wb_mult = 1 if single_buffer_weights else 2
        act_bytes = 2 * TB * D * 2 + 2 * TB * Cp * 4                # double-buffered x/out tiles
        live_bytes = 4 * TB * max(pads[1:]) * 4                     # live f32 intermediates
        vmem_needed = (act_bytes + wb_mult * (weight_bytes + bias_bytes)
                       + live_bytes + (4 << 20))
        vmem_limit = int(min(max(vmem_needed, 16 << 20), int(0.75 * vmem_cap)))

        kernel = functools.partial(_mlp_kernel, num_layers, tuple(pads[1:]))
        return pl.pallas_call(
            kernel,
            out_shape=jax.ShapeDtypeStruct((Bp, Cp), jnp.float32),
            grid_spec=pltpu.PrefetchScalarGridSpec(
                num_scalar_prefetch=0,
                grid=grid,
                in_specs=in_specs,
                out_specs=out_spec,
            ),
            compiler_params=pltpu.CompilerParams(
                dimension_semantics=("parallel",),     # batch axis -> megacore shardable
                vmem_limit_bytes=vmem_limit,
            ),
            cost_estimate=cost,
        )(x_p, *w_ps, b_packed)

    try:
        out_p = jax.block_until_ready(run(True))
    except Exception:
        # Fallback if this jax version rejects single-buffered pipeline_mode.
        out_p = jax.block_until_ready(run(False))

    return out_p[:B, :C]


def init_mlp_params(key, input_size, hidden_sizes, num_classes):
    """Deterministic parameter construction mirroring MLP.__init__.

    Hidden-layer weights use `initializer=torch.nn.init.ones_` -> all ones.
    Biases and the output-layer weight use PyTorch's default uniform
    (-1/sqrt(fan_in), 1/sqrt(fan_in)) init, sampled deterministically here.
    Weights are returned in (in, out) layout for the kernel.
    """
    unit_counts = [input_size] + list(hidden_sizes)
    weights, biases = [], []
    for in_dim, out_dim in zip(unit_counts[:-1], unit_counts[1:]):
        key, bk = jax.random.split(key)
        bound = 1.0 / jnp.sqrt(in_dim)
        w = jnp.ones((in_dim, out_dim), dtype=jnp.float32)      # ones_ initializer
        b = jax.random.uniform(bk, (1, out_dim), jnp.float32, -bound, bound)
        weights.append(w)
        biases.append(b)
    # Output layer (self.out): default PyTorch init for weight and bias.
    in_dim, out_dim = unit_counts[-1], num_classes
    key, wk, bk = jax.random.split(key, 3)
    bound = 1.0 / jnp.sqrt(in_dim)
    w_out = jax.random.uniform(wk, (in_dim, out_dim), jnp.float32, -bound, bound)
    b_out = jax.random.uniform(bk, (1, out_dim), jnp.float32, -bound, bound)
    weights.append(w_out)
    biases.append(b_out)
    return weights, biases


def mlp_reference(x, weights, biases, compute_dtype=jnp.float32):
    """Pure-JAX reference matching the PyTorch forward.

    compute_dtype=jnp.bfloat16 mirrors the kernel's bf16-operand / f32-accum
    arithmetic exactly (for tight validation); jnp.float32 is the true ref.
    """
    h = x
    n = len(weights)
    for i, (w, b) in enumerate(zip(weights, biases)):
        h = jnp.dot(h.astype(compute_dtype), w.astype(compute_dtype),
                    preferred_element_type=jnp.float32)
        h = h + jnp.reshape(b.astype(jnp.float32), (1, -1))
        if i < n - 1:
            h = jnp.maximum(h, 0.0)
    return h


if __name__ == "__main__":
    key = jax.random.PRNGKey(0)

    # Small, MLP-consistent shapes; batch=256 so the batch grid axis
    # (TB -> grid of 2 steps) and resident-weight pipelining are exercised.
    batch = 256
    input_size = 32
    hidden_sizes = [32, 32]     # hidden_size=32, hidden_count=2
    num_classes = 16

    key, xkey, pkey = jax.random.split(key, 3)
    x = jax.random.normal(xkey, (batch, input_size), dtype=jnp.float32)
    weights, biases = init_mlp_params(pkey, input_size, hidden_sizes, num_classes)

    prepared = prepare_mlp_params(weights, biases)   # one-time packing (hoisted)
    logits = jax.block_until_ready(mlp_forward(x, prepared))

    assert logits.shape == (batch, num_classes)

    # Tight check vs a bf16-matched reference; loose sanity check vs full f32.
    ref_bf16 = mlp_reference(x, weights, biases, compute_dtype=jnp.bfloat16)
    ref_f32 = mlp_reference(x, weights, biases, compute_dtype=jnp.float32)
    assert jnp.allclose(logits, ref_bf16, rtol=1e-2, atol=1e-2), \
        "mismatch vs bf16-matched reference"
    scale = float(jnp.maximum(jnp.max(jnp.abs(ref_f32)), 1.0))
    rel_err = float(jnp.max(jnp.abs(logits - ref_f32))) / scale
    assert rel_err < 5e-2, f"mismatch vs f32 reference (rel_err={rel_err})"

    print("KERNEL_OK")
</pallas_src>

<mosaic_0001>
module attributes {stable_mosaic.version = 11 : i64} {
  func.func @_mlp_kernel(%arg0: i32, %arg1: memref<128x32xbf16, #tpu.memory_space<vmem>>, %arg2: memref<32x128xbf16, #tpu.memory_space<vmem>>, %arg3: memref<128x128xbf16, #tpu.memory_space<vmem>>, %arg4: memref<128x128xbf16, #tpu.memory_space<vmem>>, %arg5: memref<3x128xf32, #tpu.memory_space<vmem>>, %arg6: memref<128x128xf32, #tpu.memory_space<vmem>>) attributes {dimension_semantics = [#tpu.dimension_semantics<parallel>], iteration_bounds = array<i64: 2>, scalar_prefetch = 0 : i64, scratch_operands = 0 : i64, tpu.core_type = #tpu.core_type<tc>, window_params = [{transform_indices = @transform_0, window_bounds = array<i64: 128, 32>}, {pipeline_mode = #tpu.pipeline_mode<synchronous>, transform_indices = @transform_1, window_bounds = array<i64: 32, 128>}, {pipeline_mode = #tpu.pipeline_mode<synchronous>, transform_indices = @transform_2, window_bounds = array<i64: 128, 128>}, {pipeline_mode = #tpu.pipeline_mode<synchronous>, transform_indices = @transform_3, window_bounds = array<i64: 128, 128>}, {pipeline_mode = #tpu.pipeline_mode<synchronous>, transform_indices = @transform_4, window_bounds = array<i64: 3, 128>}, {transform_indices = @transform_5, window_bounds = array<i64: 128, 128>}]} {
    %c0 = arith.constant 0 : index
    %c0_0 = arith.constant 0 : index
    %0 = vector.load %arg1[%c0, %c0_0] : memref<128x32xbf16, #tpu.memory_space<vmem>>, vector<128x32xbf16>
    %c0_1 = arith.constant 0 : index
    %c0_2 = arith.constant 0 : index
    %1 = vector.load %arg2[%c0_1, %c0_2] : memref<32x128xbf16, #tpu.memory_space<vmem>>, vector<32x128xbf16>
    %cst = arith.constant dense<0.000000e+00> : vector<128x128xf32>
    %2 = tpu.matmul %0, %1, %cst {dimension_numbers = #tpu.dot_dimension_numbers<[1], [0], [0], [1], [0, 0, 1, 1], [], []>} : vector<128x32xbf16>, vector<32x128xbf16>, vector<128x128xf32> -> vector<128x128xf32>
    %c0_3 = arith.constant 0 : index
    %c0_4 = arith.constant 0 : index
    %3 = vector.load %arg5[%c0_3, %c0_4] : memref<3x128xf32, #tpu.memory_space<vmem>>, vector<1x128xf32>
    %4 = vector.broadcast %3 : vector<1x128xf32> to vector<128x128xf32>
    %5 = arith.addf %2, %4 : vector<128x128xf32>
    %cst_5 = arith.constant 0.000000e+00 : f32
    %6 = vector.broadcast %cst_5 : f32 to vector<128x128xf32>
    %7 = arith.maximumf %5, %6 : vector<128x128xf32>
    %8 = arith.truncf %7 : vector<128x128xf32> to vector<128x128xbf16>
    %c0_6 = arith.constant 0 : index
    %c0_7 = arith.constant 0 : index
    %9 = vector.load %arg3[%c0_6, %c0_7] : memref<128x128xbf16, #tpu.memory_space<vmem>>, vector<128x128xbf16>
    %cst_8 = arith.constant dense<0.000000e+00> : vector<128x128xf32>
    %10 = tpu.matmul %8, %9, %cst_8 {dimension_numbers = #tpu.dot_dimension_numbers<[1], [0], [0], [1], [0, 0, 1, 1], [], []>} : vector<128x128xbf16>, vector<128x128xbf16>, vector<128x128xf32> -> vector<128x128xf32>
    %c1 = arith.constant 1 : index
    %c0_9 = arith.constant 0 : index
    %11 = vector.load %arg5[%c1, %c0_9] : memref<3x128xf32, #tpu.memory_space<vmem>>, vector<1x128xf32>
    %12 = vector.broadcast %11 : vector<1x128xf32> to vector<128x128xf32>
    %13 = arith.addf %10, %12 : vector<128x128xf32>
    %cst_10 = arith.constant 0.000000e+00 : f32
    %14 = vector.broadcast %cst_10 : f32 to vector<128x128xf32>
    %15 = arith.maximumf %13, %14 : vector<128x128xf32>
    %16 = arith.truncf %15 : vector<128x128xf32> to vector<128x128xbf16>
    %c0_11 = arith.constant 0 : index
    %c0_12 = arith.constant 0 : index
    %17 = vector.load %arg4[%c0_11, %c0_12] : memref<128x128xbf16, #tpu.memory_space<vmem>>, vector<128x128xbf16>
    %cst_13 = arith.constant dense<0.000000e+00> : vector<128x128xf32>
    %18 = tpu.matmul %16, %17, %cst_13 {dimension_numbers = #tpu.dot_dimension_numbers<[1], [0], [0], [1], [0, 0, 1, 1], [], []>} : vector<128x128xbf16>, vector<128x128xbf16>, vector<128x128xf32> -> vector<128x128xf32>
    %c2 = arith.constant 2 : index
    %c0_14 = arith.constant 0 : index
    %19 = vector.load %arg5[%c2, %c0_14] : memref<3x128xf32, #tpu.memory_space<vmem>>, vector<1x128xf32>
    %20 = vector.broadcast %19 : vector<1x128xf32> to vector<128x128xf32>
    %21 = arith.addf %18, %20 : vector<128x128xf32>
    %c0_15 = arith.constant 0 : index
    %c0_16 = arith.constant 0 : index
    %22 = vector.load %arg6[%c0_15, %c0_16] : memref<128x128xf32, #tpu.memory_space<vmem>>, vector<128x128xf32>
    tpu.vector_store %arg6[%c0_15, %c0_16], %21 {strides = array<i32>} : memref<128x128xf32, #tpu.memory_space<vmem>>, vector<128x128xf32>,
    return
  }
  func.func @transform_0(%arg0: i32) -> (i32, i32) {
    %c0_i32 = arith.constant 0 : i32
    %c0_i32_0 = arith.constant 0 : i32
    return %arg0, %c0_i32 : i32, i32
  }
  func.func @transform_1(%arg0: i32) -> (i32, i32) {
    %c0_i32 = arith.constant 0 : i32
    %c0_i32_0 = arith.constant 0 : i32
    %c0_i32_1 = arith.constant 0 : i32
    return %c0_i32, %c0_i32_0 : i32, i32
  }
  func.func @transform_2(%arg0: i32) -> (i32, i32) {
    %c0_i32 = arith.constant 0 : i32
    %c0_i32_0 = arith.constant 0 : i32
    %c0_i32_1 = arith.constant 0 : i32
    return %c0_i32, %c0_i32_0 : i32, i32
  }
  func.func @transform_3(%arg0: i32) -> (i32, i32) {
    %c0_i32 = arith.constant 0 : i32
    %c0_i32_0 = arith.constant 0 : i32
    %c0_i32_1 = arith.constant 0 : i32
    return %c0_i32, %c0_i32_0 : i32, i32
  }
  func.func @transform_4(%arg0: i32) -> (i32, i32) {
    %c0_i32 = arith.constant 0 : i32
    %c0_i32_0 = arith.constant 0 : i32
    %c0_i32_1 = arith.constant 0 : i32
    return %c0_i32, %c0_i32_0 : i32, i32
  }
  func.func @transform_5(%arg0: i32) -> (i32, i32) {
    %c0_i32 = arith.constant 0 : i32
    %c0_i32_0 = arith.constant 0 : i32
    return %arg0, %c0_i32 : i32, i32
  }
}

module attributes {stable_mosaic.version = 11 : i64} {
  func.func @_mlp_kernel(%arg0: i32, %arg1: memref<128x32xbf16, #tpu.memory_space<vmem>>, %arg2: memref<32x128xbf16, #tpu.memory_space<vmem>>, %arg3: memref<128x128xbf16, #tpu.memory_space<vmem>>, %arg4: memref<128x128xbf16, #tpu.memory_space<vmem>>, %arg5: memref<3x128xf32, #tpu.memory_space<vmem>>, %arg6: memref<128x128xf32, #tpu.memory_space<vmem>>) attributes {dimension_semantics = [#tpu.dimension_semantics<parallel>], iteration_bounds = array<i64: 2>, scalar_prefetch = 0 : i64, scratch_operands = 0 : i64, tpu.core_type = #tpu.core_type<tc>, window_params = [{transform_indices = @transform_0, window_bounds = array<i64: 128, 32>}, {pipeline_mode = #tpu.pipeline_mode<synchronous>, transform_indices = @transform_1, window_bounds = array<i64: 32, 128>}, {pipeline_mode = #tpu.pipeline_mode<synchronous>, transform_indices = @transform_2, window_bounds = array<i64: 128, 128>}, {pipeline_mode = #tpu.pipeline_mode<synchronous>, transform_indices = @transform_3, window_bounds = array<i64: 128, 128>}, {pipeline_mode = #tpu.pipeline_mode<synchronous>, transform_indices = @transform_4, window_bounds = array<i64: 3, 128>}, {transform_indices = @transform_5, window_bounds = array<i64: 128, 128>}]} {
    %c0 = arith.constant 0 : index
    %c0_0 = arith.constant 0 : index
    %0 = vector.load %arg1[%c0, %c0_0] : memref<128x32xbf16, #tpu.memory_space<vmem>>, vector<128x32xbf16>
    %c0_1 = arith.constant 0 : index
    %c0_2 = arith.constant 0 : index
    %1 = vector.load %arg2[%c0_1, %c0_2] : memref<32x128xbf16, #tpu.memory_space<vmem>>, vector<32x128xbf16>
    %cst = arith.constant dense<0.000000e+00> : vector<128x128xf32>
    %2 = tpu.matmul %0, %1, %cst {dimension_numbers = #tpu.dot_dimension_numbers<[1], [0], [0], [1], [0, 0, 1, 1], [], []>} : vector<128x32xbf16>, vector<32x128xbf16>, vector<128x128xf32> -> vector<128x128xf32>
    %c0_3 = arith.constant 0 : index
    %c0_4 = arith.constant 0 : index
    %3 = vector.load %arg5[%c0_3, %c0_4] : memref<3x128xf32, #tpu.memory_space<vmem>>, vector<1x128xf32>
    %4 = vector.broadcast %3 : vector<1x128xf32> to vector<128x128xf32>
    %5 = arith.addf %2, %4 : vector<128x128xf32>
    %cst_5 = arith.constant 0.000000e+00 : f32
    %6 = vector.broadcast %cst_5 : f32 to vector<128x128xf32>
    %7 = arith.maximumf %5, %6 : vector<128x128xf32>
    %8 = arith.truncf %7 : vector<128x128xf32> to vector<128x128xbf16>
    %c0_6 = arith.constant 0 : index
    %c0_7 = arith.constant 0 : index
    %9 = vector.load %arg3[%c0_6, %c0_7] : memref<128x128xbf16, #tpu.memory_space<vmem>>, vector<128x128xbf16>
    %cst_8 = arith.constant dense<0.000000e+00> : vector<128x128xf32>
    %10 = tpu.matmul %8, %9, %cst_8 {dimension_numbers = #tpu.dot_dimension_numbers<[1], [0], [0], [1], [0, 0, 1, 1], [], []>} : vector<128x128xbf16>, vector<128x128xbf16>, vector<128x128xf32> -> vector<128x128xf32>
    %c1 = arith.constant 1 : index
    %c0_9 = arith.constant 0 : index
    %11 = vector.load %arg5[%c1, %c0_9] : memref<3x128xf32, #tpu.memory_space<vmem>>, vector<1x128xf32>
    %12 = vector.broadcast %11 : vector<1x128xf32> to vector<128x128xf32>
    %13 = arith.addf %10, %12 : vector<128x128xf32>
    %cst_10 = arith.constant 0.000000e+00 : f32
    %14 = vector.broadcast %cst_10 : f32 to vector<128x128xf32>
    %15 = arith.maximumf %13, %14 : vector<128x128xf32>
    %16 = arith.truncf %15 : vector<128x128xf32> to vector<128x128xbf16>
    %c0_11 = arith.constant 0 : index
    %c0_12 = arith.constant 0 : index
    %17 = vector.load %arg4[%c0_11, %c0_12] : memref<128x128xbf16, #tpu.memory_space<vmem>>, vector<128x128xbf16>
    %cst_13 = arith.constant dense<0.000000e+00> : vector<128x128xf32>
    %18 = tpu.matmul %16, %17, %cst_13 {dimension_numbers = #tpu.dot_dimension_numbers<[1], [0], [0], [1], [0, 0, 1, 1], [], []>} : vector<128x128xbf16>, vector<128x128xbf16>, vector<128x128xf32> -> vector<128x128xf32>
    %c2 = arith.constant 2 : index
    %c0_14 = arith.constant 0 : index
    %19 = vector.load %arg5[%c2, %c0_14] : memref<3x128xf32, #tpu.memory_space<vmem>>, vector<1x128xf32>
    %20 = vector.broadcast %19 : vector<1x128xf32> to vector<128x128xf32>
    %21 = arith.addf %18, %20 : vector<128x128xf32>
    %c0_15 = arith.constant 0 : index
    %c0_16 = arith.constant 0 : index
    %22 = vector.load %arg6[%c0_15, %c0_16] : memref<128x128xf32, #tpu.memory_space<vmem>>, vector<128x128xf32>
    tpu.vector_store %arg6[%c0_15, %c0_16], %21 {strides = array<i32>} : memref<128x128xf32, #tpu.memory_space<vmem>>, vector<128x128xf32>,
    return
  }
  func.func @transform_0(%arg0: i32) -> (i32, i32) {
    %c0_i32 = arith.constant 0 : i32
    %c0_i32_0 = arith.constant 0 : i32
    return %arg0, %c0_i32 : i32, i32
  }
  func.func @transform_1(%arg0: i32) -> (i32, i32) {
    %c0_i32 = arith.constant 0 : i32
    %c0_i32_0 = arith.constant 0 : i32
    %c0_i32_1 = arith.constant 0 : i32
    return %c0_i32, %c0_i32_0 : i32, i32
  }
  func.func @transform_2(%arg0: i32) -> (i32, i32) {
    %c0_i32 = arith.constant 0 : i32
    %c0_i32_0 = arith.constant 0 : i32
    %c0_i32_1 = arith.constant 0 : i32
    return %c0_i32, %c0_i32_0 : i32, i32
  }
  func.func @transform_3(%arg0: i32) -> (i32, i32) {
    %c0_i32 = arith.constant 0 : i32
    %c0_i32_0 = arith.constant 0 : i32
    %c0_i32_1 = arith.constant 0 : i32
    return %c0_i32, %c0_i32_0 : i32, i32
  }
  func.func @transform_4(%arg0: i32) -> (i32, i32) {
    %c0_i32 = arith.constant 0 : i32
    %c0_i32_0 = arith.constant 0 : i32
    %c0_i32_1 = arith.constant 0 : i32
    return %c0_i32, %c0_i32_0 : i32, i32
  }
  func.func @transform_5(%arg0: i32) -> (i32, i32) {
    %c0_i32 = arith.constant 0 : i32
    %c0_i32_0 = arith.constant 0 : i32
    return %arg0, %c0_i32 : i32, i32
  }
}

</mosaic_0001>

<llo_original>
// kernel: tpu_custom_call.1
$region0: #{tpu_custom_call.1}
  #allocation0 [shape = 'u32[]', space=smem, size = 0x4, offset = 0x4, fixed_abs, tag = 'smem constant byte address 0x4 - core index']
  #allocation1 [shape = 'u32[72,128]{1,0:T(1,128)}', space=vmem, size = 0x9000, scoped, tag = 'internal scratch']
  %s0 = inlined_call_operand.vmem [shape: bf16[256,32], index: 0, kind: input, shape index: {}]
  %s1 = inlined_call_operand.vmem [shape: bf16[32,128], index: 1, kind: input, shape index: {}]
  %s2 = inlined_call_operand.vmem [shape: bf16[128,128], index: 2, kind: input, shape index: {}]
  %s3 = inlined_call_operand.vmem [shape: bf16[128,128], index: 3, kind: input, shape index: {}]
  %s4 = inlined_call_operand.vmem [shape: f32[3,128], index: 4, kind: input, shape index: {}]
  %s5 = inlined_call_operand.hbm [shape: f32[256,128], index: 5, kind: output, shape index: {}]
  %s6 = sld [smem:[#allocation0]]
  $region53: #{tpu_custom_call.1} parent=0
    _
  %s8 = ssub.s32 1, %s6
  %s9 = scalar_select 0, %s8, %s6
  $region1: #{tpu_custom_call.1} parent=0
    #allocation2 [shape = 'u8[131072]{0}', space=vmem, size = 0x20000, scoped, tag = 'output window, operand 0']
    #allocation3 [shape = 's32[2]{0}', space=sflag, size = 0x8, scoped, tag = 'scoped memory for tpu_custom_call.1']
    %10 = vsyncpa [#allocation3], 0
    %s11 = scalar_lea.sflag [#allocation3], 1
    %12 = vsyncpa %s11, 0
    loop: start=0, step=1, limit=4
    $region2: #{tpu_custom_call.1} parent=1 // loop_pre_header
      _
    $region3: #{tpu_custom_call.1} parent=1 // loop_header
      %s14 = sphi 0, %s18
      %p15 = scmp.ge.s32.totalorder %s14, 4
      %s24 = sphi 0, %s26
      %s27 = sphi 0, %s24
      %s28 = sphi 0, %s27
      %s44 = sphi 0, %s28
      %s48 = sphi 0, %s48
      %s50 = sphi 0, %s48
      %s51 = sphi 0, %s50
      %s65 = sphi 0, %s51
      %s69 = sphi 0, %s69
      %s71 = sphi 0, %s69
      %s72 = sphi 0, %s71
      %s86 = sphi 0, %s72
      %s90 = sphi 0, %s90
      %s92 = sphi 0, %s90
      %s93 = sphi 0, %s92
      %s107 = sphi 0, %s93
      %s111 = sphi 0, %s111
      %s113 = sphi 0, %s111
      %s114 = sphi 0, %s113
      %s128 = sphi 0, %s114
      %s134 = sphi 0, %s136
      %s137 = sphi 0, %s134
      %s138 = sphi 0, %s137
      %s154 = sphi 0, %s138
    $region4: #{tpu_custom_call.1} parent=1 // loop_header_branch
      %17 = sbr.rel (%p15) target = $region8
    $region5: #{tpu_custom_call.1} parent=1 // loop_body
      %s19 = ssub.s32 %s14, 1
      %s20 = ssub.s32 %s14, 2
      %s21 = sadd.s32 %s14, 1
      %s22 = ssub.s32 %s14, %s21
      %p23 = scmp.eq.s32.totalorder %s22, 0
      %s25 = sadd.s32 %s24, 1
      %s26 = scalar_select %p23, %s24, %s25
      %p29 = pneg %p23
      %p30 = scmp.eq.s32.totalorder %s14, 1
      %p31 = por %p29, %p30
      %p32 = scmp.ne.s32.totalorder %s24, %s27
      %p33 = scmp.eq.s32.totalorder %s14, 0
      %p34 = por %p32, %p33
      %p35 = scmp.ne.s32.totalorder %s24, %s27
      %p36 = scmp.eq.s32.totalorder %s19, 1
      %p37 = por %p35, %p36
      %p38 = scmp.ne.s32.totalorder %s27, %s28
      %p39 = scmp.eq.s32.totalorder %s19, 0
      %p40 = por %p38, %p39
      %p41 = scmp.ne.s32.totalorder %s27, %s28
      %p42 = scmp.eq.s32.totalorder %s20, 1
      %p43 = por %p41, %p42
      %p45 = scmp.ne.s32.totalorder %s28, %s44
      %p46 = scmp.eq.s32.totalorder %s20, 0
      %p47 = por %p45, %p46
      %s49 = sadd.s32 %s48, 1
      %p52 = scmp.eq.s32.totalorder %s14, 1
      %p53 = scmp.ne.s32.totalorder %s48, %s50
      %p54 = scmp.eq.s32.totalorder %s14, 0
      %p55 = por %p53, %p54
      %p56 = scmp.ne.s32.totalorder %s48, %s50
      %p57 = scmp.eq.s32.totalorder %s19, 1
      %p58 = por %p56, %p57
      %p59 = scmp.ne.s32.totalorder %s50, %s51
      %p60 = scmp.eq.s32.totalorder %s19, 0
      %p61 = por %p59, %p60
      %p62 = scmp.ne.s32.totalorder %s50, %s51
      %p63 = scmp.eq.s32.totalorder %s20, 1
      %p64 = por %p62, %p63
      %p66 = scmp.ne.s32.totalorder %s51, %s65
      %p67 = scmp.eq.s32.totalorder %s20, 0
      %p68 = por %p66, %p67
      %s70 = sadd.s32 %s69, 1
      %p73 = scmp.eq.s32.totalorder %s14, 1
      %p74 = scmp.ne.s32.totalorder %s69, %s71
      %p75 = scmp.eq.s32.totalorder %s14, 0
      %p76 = por %p74, %p75
      %p77 = scmp.ne.s32.totalorder %s69, %s71
      %p78 = scmp.eq.s32.totalorder %s19, 1
      %p79 = por %p77, %p78
      %p80 = scmp.ne.s32.totalorder %s71, %s72
      %p81 = scmp.eq.s32.totalorder %s19, 0
      %p82 = por %p80, %p81
      %p83 = scmp.ne.s32.totalorder %s71, %s72
      %p84 = scmp.eq.s32.totalorder %s20, 1
      %p85 = por %p83, %p84
      %p87 = scmp.ne.s32.totalorder %s72, %s86
      %p88 = scmp.eq.s32.totalorder %s20, 0
      %p89 = por %p87, %p88
      %s91 = sadd.s32 %s90, 1
      %p94 = scmp.eq.s32.totalorder %s14, 1
      %p95 = scmp.ne.s32.totalorder %s90, %s92
      %p96 = scmp.eq.s32.totalorder %s14, 0
      %p97 = por %p95, %p96
      %p98 = scmp.ne.s32.totalorder %s90, %s92
      %p99 = scmp.eq.s32.totalorder %s19, 1
      %p100 = por %p98, %p99
      %p101 = scmp.ne.s32.totalorder %s92, %s93
      %p102 = scmp.eq.s32.totalorder %s19, 0
      %p103 = por %p101, %p102
      %p104 = scmp.ne.s32.totalorder %s92, %s93
      %p105 = scmp.eq.s32.totalorder %s20, 1
      %p106 = por %p104, %p105
      %p108 = scmp.ne.s32.totalorder %s93, %s107
      %p109 = scmp.eq.s32.totalorder %s20, 0
      %p110 = por %p108, %p109
      %s112 = sadd.s32 %s111, 1
      %p115 = scmp.eq.s32.totalorder %s14, 1
      %p116 = scmp.ne.s32.totalorder %s111, %s113
      %p117 = scmp.eq.s32.totalorder %s14, 0
      %p118 = por %p116, %p117
      %p119 = scmp.ne.s32.totalorder %s111, %s113
      %p120 = scmp.eq.s32.totalorder %s19, 1
      %p121 = por %p119, %p120
      %p122 = scmp.ne.s32.totalorder %s113, %s114
      %p123 = scmp.eq.s32.totalorder %s19, 0
      %p124 = por %p122, %p123
      %p125 = scmp.ne.s32.totalorder %s113, %s114
      %p126 = scmp.eq.s32.totalorder %s20, 1
      %p127 = por %p125, %p126
      %p129 = scmp.ne.s32.totalorder %s114, %s128
      %p130 = scmp.eq.s32.totalorder %s20, 0
      %p131 = por %p129, %p130
      %s132 = ssub.s32 %s14, %s21
      %p133 = scmp.eq.s32.totalorder %s132, 0
      %s135 = sadd.s32 %s134, 1
      %s136 = scalar_select %p133, %s134, %s135
      %p139 = pneg %p133
      %p140 = scmp.eq.s32.totalorder %s14, 1
      %p141 = por %p139, %p140
      %p142 = scmp.ne.s32.totalorder %s134, %s137
      %p143 = scmp.eq.s32.totalorder %s14, 0
      %p144 = por %p142, %p143
      %p145 = scmp.ne.s32.totalorder %s134, %s137
      %p146 = scmp.eq.s32.totalorder %s19, 1
      %p147 = por %p145, %p146
      %p148 = scmp.ne.s32.totalorder %s137, %s138
      %p149 = scmp.eq.s32.totalorder %s19, 0
      %p150 = por %p148, %p149
      %p151 = scmp.ne.s32.totalorder %s137, %s138
      %p152 = scmp.eq.s32.totalorder %s20, 1
      %p153 = por %p151, %p152
      %p155 = scmp.ne.s32.totalorder %s138, %s154
      %p156 = scmp.eq.s32.totalorder %s20, 0
      %p157 = por %p155, %p156
      %p158 = scmp.le.s32.totalorder 1, %s14
      %p159 = scmp.lt.s32.totalorder %s14, 3
      %p160 = pnand %p158, %p159
      %p161 = pneg %p160
      // Predicated region
      $region9: #{tpu_custom_call.1} parent=5 // pred_check
        _
      $region10: #{tpu_custom_call.1} parent=5 // pred_check_branch
        %163 = sbr.rel (%p160) target = $region12
      $region11: #{tpu_custom_call.1} parent=5 // pred_region
        %s164 = ssub.s32 %s14, 1
        // Predicated region
        $region13: #{tpu_custom_call.1} parent=11 // pred_check
          %p165 = pneg %p61
        $region14: #{tpu_custom_call.1} parent=11 // pred_check_branch
          %167 = sbr.rel (%p165) target = $region16
        $region15: #{tpu_custom_call.1} parent=11 // pred_region
          _
        $region16: #{tpu_custom_call.1} parent=11 // pred_fallthru
          _
        // Predicated region
        $region17: #{tpu_custom_call.1} parent=11 // pred_check
          %p168 = pneg %p82
        $region18: #{tpu_custom_call.1} parent=11 // pred_check_branch
          %170 = sbr.rel (%p168) target = $region20
        $region19: #{tpu_custom_call.1} parent=11 // pred_region
          _
        $region20: #{tpu_custom_call.1} parent=11 // pred_fallthru
          _
        // Predicated region
        $region21: #{tpu_custom_call.1} parent=11 // pred_check
          %p171 = pneg %p103
        $region22: #{tpu_custom_call.1} parent=11 // pred_check_branch
          %173 = sbr.rel (%p171) target = $region24
        $region23: #{tpu_custom_call.1} parent=11 // pred_region
          _
        $region24: #{tpu_custom_call.1} parent=11 // pred_fallthru
          _
        // Predicated region
        $region25: #{tpu_custom_call.1} parent=11 // pred_check
          %p174 = pneg %p124
        $region26: #{tpu_custom_call.1} parent=11 // pred_check_branch
          %176 = sbr.rel (%p174) target = $region28
        $region27: #{tpu_custom_call.1} parent=11 // pred_region
          _
        $region28: #{tpu_custom_call.1} parent=11 // pred_fallthru
          _
      $region12: #{tpu_custom_call.1} parent=5 // pred_fallthru
        _
      %p177 = scmp.lt.s32.totalorder %s14, 2
      // Predicated region
      $region29: #{tpu_custom_call.1} parent=5 // pred_check
        %p178 = pneg %p177
      $region30: #{tpu_custom_call.1} parent=5 // pred_check_branch
        %180 = sbr.rel (%p178) target = $region32
      $region31: #{tpu_custom_call.1} parent=5 // pred_region
        // Predicated region
        $region33: #{tpu_custom_call.1} parent=31 // pred_check
          %p181 = pneg %p34
        $region34: #{tpu_custom_call.1} parent=31 // pred_check_branch
          %183 = sbr.rel (%p181) target = $region36
        $region35: #{tpu_custom_call.1} parent=31 // pred_region
          %s184 = smul.u32 16, %s14
          %p185 = scmp.lt.s32.totalorder %s184, 31
          %s186 = scalar_select %p185, %s184, 31
          %s187 = smul.addr %s186, 4
          %s188 = scalar_lea.vmem %s0, %s187
          %s189 = smul.u32 16, %s14
        $region36: #{tpu_custom_call.1} parent=31 // pred_fallthru
          _
      $region32: #{tpu_custom_call.1} parent=5 // pred_fallthru
        _
      %p190 = scmp.le.s32.totalorder 1, %s14
      %p191 = scmp.lt.s32.totalorder %s14, 3
      %p192 = pnand %p190, %p191
      %p193 = pneg %p192
      // Predicated region
      $region37: #{tpu_custom_call.1} parent=5 // pred_check
        _
      $region38: #{tpu_custom_call.1} parent=5 // pred_check_branch
        %195 = sbr.rel (%p192) target = $region40
      $region39: #{tpu_custom_call.1} parent=5 // pred_region
        %s196 = ssub.s32 %s14, 1
        %s197 = smul.u32 16, %s19
        %p198 = scmp.lt.s32.totalorder %s197, 31
        %s199 = scalar_select %p198, %s197, 31
        %s200 = smul.addr %s199, 4
        %s201 = scalar_lea.vmem %s0, %s200
        %p202 = pneg %p40
        %p203 = pneg %p37
        %p204 = pneg %p61
        %p205 = pneg %p58
        %p206 = pneg %p82
        %p207 = pneg %p79
        %p208 = pneg %p103
        %p209 = pneg %p100
        %p210 = pneg %p124
        %p211 = pneg %p121
        %p212 = pneg %p150
        %p213 = pneg %p147
        %s214 = sand.u32 %s137, 1
        %s215 = scalar_lea.sflag [#allocation3], %s214
        %s216 = sand.u32 %s137, 1
        %s217 = smul.addr %s216, 128
        %s218 = scalar_lea.vmem [#allocation2], %s217
        %s219 = smul.u32 16, %s19
        %p220 = scmp.lt.s32.totalorder %s219, 31
        %s221 = scalar_select %p220, %s219, 31
        %s222 = smul.addr %s221, 4
        %s223 = scalar_lea.vmem %s0, %s222
        %s224 = smul.u32 16, %s19
        %s225 = smul.u32 16, %s19
        %v227 = vld [vmem:[%s223] sm:$0xf]
        %v228 = vld [vmem:[%s223 + $0x4] sm:$0xf]
        %v229 = vld [vmem:[%s223 + $0x8] sm:$0xf]
        %v230 = vld [vmem:[%s223 + $0xc] sm:$0xf]
        %v231 = vld [vmem:[%s223 + $0x10] sm:$0xf]
        %v232 = vld [vmem:[%s223 + $0x14] sm:$0xf]
        %v233 = vld [vmem:[%s223 + $0x18] sm:$0xf]
        %v234 = vld [vmem:[%s223 + $0x1c] sm:$0xf]
        %v235 = vld [vmem:[%s223 + $0x20] sm:$0xf]
        %v236 = vld [vmem:[%s223 + $0x24] sm:$0xf]
        %v237 = vld [vmem:[%s223 + $0x28] sm:$0xf]
        %v238 = vld [vmem:[%s223 + $0x2c] sm:$0xf]
        %v239 = vld [vmem:[%s223 + $0x30] sm:$0xf]
        %v240 = vld [vmem:[%s223 + $0x34] sm:$0xf]
        %v241 = vld [vmem:[%s223 + $0x38] sm:$0xf]
        %v242 = vld [vmem:[%s223 + $0x3c] sm:$0xf]
        %v243 = vld [vmem:[%s1] sm:$0xf]
        %v244 = vld [vmem:[%s1 + $0x4] sm:$0xf]
        %v245 = vld [vmem:[%s1 + $0x8] sm:$0xf]
        %v246 = vld [vmem:[%s1 + $0xc] sm:$0xf]
        %v247 = vld [vmem:[%s4] sm:$0x1]
        %v248 = vperm.slane %v247, 0
        %v265 = vunpack.c.l.b16 %v227
        %v266 = vunpack.c.l.b16 %v228
        %v267 = vunpack.c.l.b16 %v229
        %v268 = vunpack.c.l.b16 %v230
        %v269 = vunpack.c.l.b16 %v231
        %v270 = vunpack.c.l.b16 %v232
        %v271 = vunpack.c.l.b16 %v233
        %v272 = vunpack.c.l.b16 %v234
        %v273 = vunpack.c.l.b16 %v235
        %v274 = vunpack.c.l.b16 %v236
        %v275 = vunpack.c.l.b16 %v237
        %v276 = vunpack.c.l.b16 %v238
        %v277 = vunpack.c.l.b16 %v239
        %v278 = vunpack.c.l.b16 %v240
        %v279 = vunpack.c.l.b16 %v241
        %v280 = vunpack.c.l.b16 %v242
        %v281 = vpack.c.b16 %v266, %v265
        %v282 = vpack.c.b16 %v268, %v267
        %v283 = vpack.c.b16 %v270, %v269
        %v284 = vpack.c.b16 %v272, %v271
        %v285 = vpack.c.b16 %v274, %v273
        %v286 = vpack.c.b16 %v276, %v275
        %v287 = vpack.c.b16 %v278, %v277
        %v288 = vpack.c.b16 %v280, %v279
        %v293 = vunpack.c.l.b16 %v243
        %v294 = vunpack.c.l.b16 %v244
        %v295 = vunpack.c.l.b16 %v245
        %v296 = vunpack.c.l.b16 %v246
        %v297 = vpack.c.b16 %v294, %v293
        %v298 = vpack.c.b16 %v296, %v295
        %vm301 = vcmask 261120
        %v303 = vsel %vm301, %v281, 0
        %v306 = vsel %vm301, %v282, 0
        %v309 = vsel %vm301, %v283, 0
        %v312 = vsel %vm301, %v284, 0
        %v315 = vsel %vm301, %v285, 0
        %v318 = vsel %vm301, %v286, 0
        %v321 = vsel %vm301, %v287, 0
        %v324 = vsel %vm301, %v288, 0
        %326 = vmatpush.bf16.msra.mxu0 0
        %327 = vmatpush.bf16.msra.mxu0 0
        %328 = vmatpush.bf16.msra.mxu0 0
        %329 = vmatpush.bf16.msra.mxu0 0
        %330 = vmatpush.bf16.msra.mxu0 0
        %331 = vmatpush.bf16.msra.mxu0 0
        %332 = vmatpush.bf16.msra.mxu0 %v298
        %333 = vmatpush.bf16.msra.mxu0 %v297
        %334 = vmatmul.bf16.gmra.mxu0 %v303
        %v335 = vpop.f32.mrf.mxu0
        %v336 = vadd.f32 %v248, %v335
        %v337 = vpop.f32.mrf.mxu0
        %v338 = vadd.f32 %v248, %v337
        %339 = vmatmul.bf16.gmra.mxu0 %v306
        %v340 = vpop.f32.mrf.mxu0
        %v341 = vadd.f32 %v248, %v340
        %v342 = vpop.f32.mrf.mxu0
        %v343 = vadd.f32 %v248, %v342
        %344 = vmatmul.bf16.gmra.mxu0 %v309
        %v345 = vpop.f32.mrf.mxu0
        %v346 = vadd.f32 %v248, %v345
        %v347 = vpop.f32.mrf.mxu0
        %v348 = vadd.f32 %v248, %v347
        %349 = vmatmul.bf16.gmra.mxu0 %v312
        %v350 = vpop.f32.mrf.mxu0
        %v351 = vadd.f32 %v248, %v350
        %v352 = vpop.f32.mrf.mxu0
        %v353 = vadd.f32 %v248, %v352
        %354 = vmatmul.bf16.gmra.mxu0 %v315
        %v355 = vpop.f32.mrf.mxu0
        %v356 = vadd.f32 %v248, %v355
        %v357 = vpop.f32.mrf.mxu0
        %v358 = vadd.f32 %v248, %v357
        %359 = vmatmul.bf16.gmra.mxu0 %v318
        %v360 = vpop.f32.mrf.mxu0
        %v361 = vadd.f32 %v248, %v360
        %v362 = vpop.f32.mrf.mxu0
        %v363 = vadd.f32 %v248, %v362
        %364 = vmatmul.bf16.gmra.mxu0 %v321
        %v365 = vpop.f32.mrf.mxu0
        %v366 = vadd.f32 %v248, %v365
        %v367 = vpop.f32.mrf.mxu0
        %v368 = vadd.f32 %v248, %v367
        %369 = vmatmul.bf16.gmra.mxu0 %v324
        %v370 = vpop.f32.mrf.mxu0
        %v371 = vadd.f32 %v248, %v370
        %v372 = vpop.f32.mrf.mxu0
        %v373 = vadd.f32 %v248, %v372
        %374 = vdwg.mxu0
        %v375 = vmax.f32 %v336, 0.0
        %v376 = vmax.f32 %v338, 0.0
        %v377 = vmax.f32 %v341, 0.0
        %v378 = vmax.f32 %v343, 0.0
        %v379 = vmax.f32 %v346, 0.0
        %v380 = vmax.f32 %v348, 0.0
        %v381 = vmax.f32 %v351, 0.0
        %v382 = vmax.f32 %v353, 0.0
        %v383 = vmax.f32 %v356, 0.0
        %v384 = vmax.f32 %v358, 0.0
        %v385 = vmax.f32 %v361, 0.0
        %v386 = vmax.f32 %v363, 0.0
        %v387 = vmax.f32 %v366, 0.0
        %v388 = vmax.f32 %v368, 0.0
        %v389 = vmax.f32 %v371, 0.0
        %v390 = vmax.f32 %v373, 0.0
        %v391 = vpack.c.bf16 %v376, %v375
        %v392 = vpack.c.bf16 %v378, %v377
        %v393 = vpack.c.bf16 %v380, %v379
        %v394 = vpack.c.bf16 %v382, %v381
        %v395 = vpack.c.bf16 %v384, %v383
        %v396 = vpack.c.bf16 %v386, %v385
        %v397 = vpack.c.bf16 %v388, %v387
        %v398 = vpack.c.bf16 %v390, %v389
        %v399 = vld [vmem:[%s2] sm:$0xf]
        %v400 = vld [vmem:[%s2 + $0x4] sm:$0xf]
        %v401 = vld [vmem:[%s2 + $0x8] sm:$0xf]
        %v402 = vld [vmem:[%s2 + $0xc] sm:$0xf]
        %v403 = vld [vmem:[%s2 + $0x10] sm:$0xf]
        %v404 = vld [vmem:[%s2 + $0x14] sm:$0xf]
        %v405 = vld [vmem:[%s2 + $0x18] sm:$0xf]
        %v406 = vld [vmem:[%s2 + $0x1c] sm:$0xf]
        %v407 = vld [vmem:[%s2 + $0x20] sm:$0xf]
        %v408 = vld [vmem:[%s2 + $0x24] sm:$0xf]
        %v409 = vld [vmem:[%s2 + $0x28] sm:$0xf]
        %v410 = vld [vmem:[%s2 + $0x2c] sm:$0xf]
        %v411 = vld [vmem:[%s2 + $0x30] sm:$0xf]
        %v412 = vld [vmem:[%s2 + $0x34] sm:$0xf]
        %v413 = vld [vmem:[%s2 + $0x38] sm:$0xf]
        %v414 = vld [vmem:[%s2 + $0x3c] sm:$0xf]
        %v415 = vld [vmem:[%s4 + $0x1] sm:$0x1]
        %v416 = vperm.slane %v415, 0
        %v433 = vunpack.c.l.b16 %v399
        %v434 = vunpack.c.l.b16 %v400
        %v435 = vunpack.c.l.b16 %v401
        %v436 = vunpack.c.l.b16 %v402
        %v437 = vunpack.c.l.b16 %v403
        %v438 = vunpack.c.l.b16 %v404
        %v439 = vunpack.c.l.b16 %v405
        %v440 = vunpack.c.l.b16 %v406
        %v441 = vunpack.c.l.b16 %v407
        %v442 = vunpack.c.l.b16 %v408
        %v443 = vunpack.c.l.b16 %v409
        %v444 = vunpack.c.l.b16 %v410
        %v445 = vunpack.c.l.b16 %v411
        %v446 = vunpack.c.l.b16 %v412
        %v447 = vunpack.c.l.b16 %v413
        %v448 = vunpack.c.l.b16 %v414
        %v449 = vpack.c.b16 %v434, %v433
        %v450 = vpack.c.b16 %v436, %v435
        %v451 = vpack.c.b16 %v438, %v437
        %v452 = vpack.c.b16 %v440, %v439
        %v453 = vpack.c.b16 %v442, %v441
        %v454 = vpack.c.b16 %v444, %v443
        %v455 = vpack.c.b16 %v446, %v445
        %v456 = vpack.c.b16 %v448, %v447
        %465 = vmatpush.bf16.msra.mxu0 %v456
        %466 = vmatpush.bf16.msra.mxu0 %v455
        %467 = vmatpush.bf16.msra.mxu0 %v454
        %468 = vmatpush.bf16.msra.mxu0 %v453
        %469 = vmatpush.bf16.msra.mxu0 %v452
        %470 = vmatpush.bf16.msra.mxu0 %v451
        %471 = vmatpush.bf16.msra.mxu0 %v450
        %472 = vmatpush.bf16.msra.mxu0 %v449
        %473 = vmatmul.bf16.gmra.mxu0 %v391
        %v474 = vpop.f32.mrf.mxu0
        %v475 = vadd.f32 %v416, %v474
        %v476 = vpop.f32.mrf.mxu0
        %v477 = vadd.f32 %v416, %v476
        %478 = vmatmul.bf16.gmra.mxu0 %v392
        %v479 = vpop.f32.mrf.mxu0
        %v480 = vadd.f32 %v416, %v479
        %v481 = vpop.f32.mrf.mxu0
        %v482 = vadd.f32 %v416, %v481
        %483 = vmatmul.bf16.gmra.mxu0 %v393
        %v484 = vpop.f32.mrf.mxu0
        %v485 = vadd.f32 %v416, %v484
        %v486 = vpop.f32.mrf.mxu0
        %v487 = vadd.f32 %v416, %v486
        %488 = vmatmul.bf16.gmra.mxu0 %v394
        %v489 = vpop.f32.mrf.mxu0
        %v490 = vadd.f32 %v416, %v489
        %v491 = vpop.f32.mrf.mxu0
        %v492 = vadd.f32 %v416, %v491
        %493 = vmatmul.bf16.gmra.mxu0 %v395
        %v494 = vpop.f32.mrf.mxu0
        %v495 = vadd.f32 %v416, %v494
        %v496 = vpop.f32.mrf.mxu0
        %v497 = vadd.f32 %v416, %v496
        %498 = vmatmul.bf16.gmra.mxu0 %v396
        %v499 = vpop.f32.mrf.mxu0
        %v500 = vadd.f32 %v416, %v499
        %v501 = vpop.f32.mrf.mxu0
        %v502 = vadd.f32 %v416, %v501
        %503 = vmatmul.bf16.gmra.mxu0 %v397
        %v504 = vpop.f32.mrf.mxu0
        %v505 = vadd.f32 %v416, %v504
        %v506 = vpop.f32.mrf.mxu0
        %v507 = vadd.f32 %v416, %v506
        %508 = vmatmul.bf16.gmra.mxu0 %v398
        %v509 = vpop.f32.mrf.mxu0
        %v510 = vadd.f32 %v416, %v509
        %v511 = vpop.f32.mrf.mxu0
        %v512 = vadd.f32 %v416, %v511
        %513 = vdwg.mxu0
        %v514 = vmax.f32 %v475, 0.0
        %v515 = vmax.f32 %v477, 0.0
        %v516 = vmax.f32 %v480, 0.0
        %v517 = vmax.f32 %v482, 0.0
        %v518 = vmax.f32 %v485, 0.0
        %v519 = vmax.f32 %v487, 0.0
        %v520 = vmax.f32 %v490, 0.0
        %v521 = vmax.f32 %v492, 0.0
        %v522 = vmax.f32 %v495, 0.0
        %v523 = vmax.f32 %v497, 0.0
        %v524 = vmax.f32 %v500, 0.0
        %v525 = vmax.f32 %v502, 0.0
        %v526 = vmax.f32 %v505, 0.0
        %v527 = vmax.f32 %v507, 0.0
        %v528 = vmax.f32 %v510, 0.0
        %v529 = vmax.f32 %v512, 0.0
        %v530 = vpack.c.bf16 %v515, %v514
        %v531 = vpack.c.bf16 %v517, %v516
        %v532 = vpack.c.bf16 %v519, %v518
        %v533 = vpack.c.bf16 %v521, %v520
        %v534 = vpack.c.bf16 %v523, %v522
        %v535 = vpack.c.bf16 %v525, %v524
        %v536 = vpack.c.bf16 %v527, %v526
        %v537 = vpack.c.bf16 %v529, %v528
        %v538 = vld [vmem:[%s3] sm:$0xf]
        %v539 = vld [vmem:[%s3 + $0x4] sm:$0xf]
        %v540 = vld [vmem:[%s3 + $0x8] sm:$0xf]
        %v541 = vld [vmem:[%s3 + $0xc] sm:$0xf]
        %v542 = vld [vmem:[%s3 + $0x10] sm:$0xf]
        %v543 = vld [vmem:[%s3 + $0x14] sm:$0xf]
        %v544 = vld [vmem:[%s3 + $0x18] sm:$0xf]
        %v545 = vld [vmem:[%s3 + $0x1c] sm:$0xf]
        %v546 = vld [vmem:[%s3 + $0x20] sm:$0xf]
        %v547 = vld [vmem:[%s3 + $0x24] sm:$0xf]
        %v548 = vld [vmem:[%s3 + $0x28] sm:$0xf]
        %v549 = vld [vmem:[%s3 + $0x2c] sm:$0xf]
        %v550 = vld [vmem:[%s3 + $0x30] sm:$0xf]
        %v551 = vld [vmem:[%s3 + $0x34] sm:$0xf]
        %v552 = vld [vmem:[%s3 + $0x38] sm:$0xf]
        %v553 = vld [vmem:[%s3 + $0x3c] sm:$0xf]
        %v554 = vld [vmem:[%s4 + $0x2] sm:$0x1]
        %v555 = vperm.slane %v554, 0
        %v572 = vunpack.c.l.b16 %v538
        %v573 = vunpack.c.l.b16 %v539
        %v574 = vunpack.c.l.b16 %v540
        %v575 = vunpack.c.l.b16 %v541
        %v576 = vunpack.c.l.b16 %v542
        %v577 = vunpack.c.l.b16 %v543
        %v578 = vunpack.c.l.b16 %v544
        %v579 = vunpack.c.l.b16 %v545
        %v580 = vunpack.c.l.b16 %v546
        %v581 = vunpack.c.l.b16 %v547
        %v582 = vunpack.c.l.b16 %v548
        %v583 = vunpack.c.l.b16 %v549
        %v584 = vunpack.c.l.b16 %v550
        %v585 = vunpack.c.l.b16 %v551
        %v586 = vunpack.c.l.b16 %v552
        %v587 = vunpack.c.l.b16 %v553
        %v588 = vpack.c.b16 %v573, %v572
        %v589 = vpack.c.b16 %v575, %v574
        %v590 = vpack.c.b16 %v577, %v576
        %v591 = vpack.c.b16 %v579, %v578
        %v592 = vpack.c.b16 %v581, %v580
        %v593 = vpack.c.b16 %v583, %v582
        %v594 = vpack.c.b16 %v585, %v584
        %v595 = vpack.c.b16 %v587, %v586
        %604 = vmatpush.bf16.msra.mxu0 %v595
        %605 = vmatpush.bf16.msra.mxu0 %v594
        %606 = vmatpush.bf16.msra.mxu0 %v593
        %607 = vmatpush.bf16.msra.mxu0 %v592
        %608 = vmatpush.bf16.msra.mxu0 %v591
        %609 = vmatpush.bf16.msra.mxu0 %v590
        %610 = vmatpush.bf16.msra.mxu0 %v589
        %611 = vmatpush.bf16.msra.mxu0 %v588
        %612 = vmatmul.bf16.gmra.mxu0 %v530
        %v613 = vpop.f32.mrf.mxu0
        %v614 = vadd.f32 %v555, %v613
        %v615 = vpop.f32.mrf.mxu0
        %v616 = vadd.f32 %v555, %v615
        %617 = vmatmul.bf16.gmra.mxu0 %v531
        %v618 = vpop.f32.mrf.mxu0
        %v619 = vadd.f32 %v555, %v618
        %v620 = vpop.f32.mrf.mxu0
        %v621 = vadd.f32 %v555, %v620
        %622 = vmatmul.bf16.gmra.mxu0 %v532
        %v623 = vpop.f32.mrf.mxu0
        %v624 = vadd.f32 %v555, %v623
        %v625 = vpop.f32.mrf.mxu0
        %v626 = vadd.f32 %v555, %v625
        %627 = vmatmul.bf16.gmra.mxu0 %v533
        %v628 = vpop.f32.mrf.mxu0
        %v629 = vadd.f32 %v555, %v628
        %v630 = vpop.f32.mrf.mxu0
        %v631 = vadd.f32 %v555, %v630
        %632 = vmatmul.bf16.gmra.mxu0 %v534
        %v633 = vpop.f32.mrf.mxu0
        %v634 = vadd.f32 %v555, %v633
        %v635 = vpop.f32.mrf.mxu0
        %v636 = vadd.f32 %v555, %v635
        %637 = vmatmul.bf16.gmra.mxu0 %v535
        %v638 = vpop.f32.mrf.mxu0
        %v639 = vadd.f32 %v555, %v638
        %v640 = vpop.f32.mrf.mxu0
        %v641 = vadd.f32 %v555, %v640
        %642 = vmatmul.bf16.gmra.mxu0 %v536
        %v643 = vpop.f32.mrf.mxu0
        %v644 = vadd.f32 %v555, %v643
        %v645 = vpop.f32.mrf.mxu0
        %v646 = vadd.f32 %v555, %v645
        %647 = vmatmul.bf16.gmra.mxu0 %v537
        %v648 = vpop.f32.mrf.mxu0
        %v649 = vadd.f32 %v555, %v648
        %v650 = vpop.f32.mrf.mxu0
        %v651 = vadd.f32 %v555, %v650
        %652 = vdwg.mxu0
        %653 = vst [vmem:[%s218] sm:$0xff] %v614
        %654 = vst [vmem:[%s218 + $0x8] sm:$0xff] %v616
        %655 = vst [vmem:[%s218 + $0x10] sm:$0xff] %v619
        %656 = vst [vmem:[%s218 + $0x18] sm:$0xff] %v621
        %657 = vst [vmem:[%s218 + $0x20] sm:$0xff] %v624
        %658 = vst [vmem:[%s218 + $0x28] sm:$0xff] %v626
        %659 = vst [vmem:[%s218 + $0x30] sm:$0xff] %v629
        %660 = vst [vmem:[%s218 + $0x38] sm:$0xff] %v631
        %661 = vst [vmem:[%s218 + $0x40] sm:$0xff] %v634
        %662 = vst [vmem:[%s218 + $0x48] sm:$0xff] %v636
        %663 = vst [vmem:[%s218 + $0x50] sm:$0xff] %v639
        %664 = vst [vmem:[%s218 + $0x58] sm:$0xff] %v641
        %665 = vst [vmem:[%s218 + $0x60] sm:$0xff] %v644
        %666 = vst [vmem:[%s218 + $0x68] sm:$0xff] %v646
        %667 = vst [vmem:[%s218 + $0x70] sm:$0xff] %v649
        %668 = vst [vmem:[%s218 + $0x78] sm:$0xff] %v651
        %s669 = sand.u32 %s137, 1
        %s670 = scalar_lea.sflag [#allocation3], %s669
        %s671 = sand.u32 %s137, 1
        %s672 = smul.addr %s671, 128
        %s673 = scalar_lea.vmem [#allocation2], %s672
        // Predicated region
        $region41: #{tpu_custom_call.1} parent=39 // pred_check
          %p674 = pneg %p147
        $region42: #{tpu_custom_call.1} parent=39 // pred_check_branch
          %676 = sbr.rel (%p674) target = $region44
        $region43: #{tpu_custom_call.1} parent=39 // pred_region
          %s677 = smul.u32 16, %s19
          %679 = vsyncadd %s670, 0
          %s680 = smul.addr %s677, 8
          %s681 = scalar_lea.hbm %s5, %s680
          %s682 = sshll.u32 %s673, 4
          %s683 = int_to_ptr.vmem [resolvable:$true] %s682
          %s684 = sshll.u32 %s681, 4
          %s685 = int_to_ptr.hbm [resolvable:$true] %s684
          %690 = dma.vmem_to_hbm [thread:$0]  %s683, 2048, %s685, %s670, 128, 128, 8
        $region44: #{tpu_custom_call.1} parent=39 // pred_fallthru
          _
      $region40: #{tpu_custom_call.1} parent=5 // pred_fallthru
        _
      %p691 = scmp.le.s32.totalorder 2, %s14
      // Predicated region
      $region45: #{tpu_custom_call.1} parent=5 // pred_check
        %p692 = pneg %p691
      $region46: #{tpu_custom_call.1} parent=5 // pred_check_branch
        %694 = sbr.rel (%p692) target = $region48
      $region47: #{tpu_custom_call.1} parent=5 // pred_region
        %s695 = ssub.s32 %s14, 2
        // Predicated region
        $region49: #{tpu_custom_call.1} parent=47 // pred_check
          %p696 = pneg %p153
        $region50: #{tpu_custom_call.1} parent=47 // pred_check_branch
          %698 = sbr.rel (%p696) target = $region52
        $region51: #{tpu_custom_call.1} parent=47 // pred_region
          %s699 = sand.u32 %s138, 1
          %s700 = scalar_lea.sflag [#allocation3], %s699
          %s701 = sand.u32 %s138, 1
          %s702 = smul.addr %s701, 128
          %s703 = scalar_lea.vmem [#allocation2], %s702
          %705 = dma.done %s700, 2048
        $region52: #{tpu_custom_call.1} parent=47 // pred_fallthru
          _
      $region48: #{tpu_custom_call.1} parent=5 // pred_fallthru
        _
    $region6: #{tpu_custom_call.1} parent=1 // loop_footer
      %s18 = sadd.s32 1, %s14
    $region7: #{tpu_custom_call.1} parent=1 // loop_footer_branch
      %13 = sbr.rel target = $region3
    $region8: #{tpu_custom_call.1} parent=1 // loop_exit
      _
    %706 = vsyncpa [#allocation3], 1
    %s707 = scalar_lea.sflag [#allocation3], 1
    %708 = vsyncpa %s707, 1

// kernel: tpu_custom_call.1
$region0: #{tpu_custom_call.1}
  #allocation0 [shape = 'u32[]', space=smem, size = 0x4, offset = 0x4, fixed_abs, tag = 'smem constant byte address 0x4 - core index']
  #allocation1 [shape = 'u32[72,128]{1,0:T(1,128)}', space=vmem, size = 0x9000, scoped, tag = 'internal scratch']
  %s0 = inlined_call_operand.vmem [shape: bf16[256,32], index: 0, kind: input, shape index: {}]
  %s1 = inlined_call_operand.vmem [shape: bf16[32,128], index: 1, kind: input, shape index: {}]
  %s2 = inlined_call_operand.vmem [shape: bf16[128,128], index: 2, kind: input, shape index: {}]
  %s3 = inlined_call_operand.vmem [shape: bf16[128,128], index: 3, kind: input, shape index: {}]
  %s4 = inlined_call_operand.vmem [shape: f32[3,128], index: 4, kind: input, shape index: {}]
  %s5 = inlined_call_operand.hbm [shape: f32[256,128], index: 5, kind: output, shape index: {}]
  %s6 = sld [smem:[#allocation0]]
  $region53: #{tpu_custom_call.1} parent=0
    _
  %s8 = ssub.s32 1, %s6
  %s9 = scalar_select 0, %s8, %s6
  $region1: #{tpu_custom_call.1} parent=0
    #allocation2 [shape = 'u8[131072]{0}', space=vmem, size = 0x20000, scoped, tag = 'output window, operand 0']
    #allocation3 [shape = 's32[2]{0}', space=sflag, size = 0x8, scoped, tag = 'scoped memory for tpu_custom_call.1']
    %10 = vsyncpa [#allocation3], 0
    %s11 = scalar_lea.sflag [#allocation3], 1
    %12 = vsyncpa %s11, 0
    loop: start=0, step=1, limit=4
    $region2: #{tpu_custom_call.1} parent=1 // loop_pre_header
      _
    $region3: #{tpu_custom_call.1} parent=1 // loop_header
      %s14 = sphi 0, %s18
      %p15 = scmp.ge.s32.totalorder %s14, 4
      %s24 = sphi 0, %s26
      %s27 = sphi 0, %s24
      %s28 = sphi 0, %s27
      %s44 = sphi 0, %s28
      %s48 = sphi 0, %s48
      %s50 = sphi 0, %s48
      %s51 = sphi 0, %s50
      %s65 = sphi 0, %s51
      %s69 = sphi 0, %s69
      %s71 = sphi 0, %s69
      %s72 = sphi 0, %s71
      %s86 = sphi 0, %s72
      %s90 = sphi 0, %s90
      %s92 = sphi 0, %s90
      %s93 = sphi 0, %s92
      %s107 = sphi 0, %s93
      %s111 = sphi 0, %s111
      %s113 = sphi 0, %s111
      %s114 = sphi 0, %s113
      %s128 = sphi 0, %s114
      %s134 = sphi 0, %s136
      %s137 = sphi 0, %s134
      %s138 = sphi 0, %s137
      %s154 = sphi 0, %s138
    $region4: #{tpu_custom_call.1} parent=1 // loop_header_branch
      %17 = sbr.rel (%p15) target = $region8
    $region5: #{tpu_custom_call.1} parent=1 // loop_body
      %s19 = ssub.s32 %s14, 1
      %s20 = ssub.s32 %s14, 2
      %s21 = sadd.s32 %s14, 1
      %s22 = ssub.s32 %s14, %s21
      %p23 = scmp.eq.s32.totalorder %s22, 0
      %s25 = sadd.s32 %s24, 1
      %s26 = scalar_select %p23, %s24, %s25
      %p29 = pneg %p23
      %p30 = scmp.eq.s32.totalorder %s14, 1
      %p31 = por %p29, %p30
      %p32 = scmp.ne.s32.totalorder %s24, %s27
      %p33 = scmp.eq.s32.totalorder %s14, 0
      %p34 = por %p32, %p33
      %p35 = scmp.ne.s32.totalorder %s24, %s27
      %p36 = scmp.eq.s32.totalorder %s19, 1
      %p37 = por %p35, %p36
      %p38 = scmp.ne.s32.totalorder %s27, %s28
      %p39 = scmp.eq.s32.totalorder %s19, 0
      %p40 = por %p38, %p39
      %p41 = scmp.ne.s32.totalorder %s27, %s28
      %p42 = scmp.eq.s32.totalorder %s20, 1
      %p43 = por %p41, %p42
      %p45 = scmp.ne.s32.totalorder %s28, %s44
      %p46 = scmp.eq.s32.totalorder %s20, 0
      %p47 = por %p45, %p46
      %s49 = sadd.s32 %s48, 1
      %p52 = scmp.eq.s32.totalorder %s14, 1
      %p53 = scmp.ne.s32.totalorder %s48, %s50
      %p54 = scmp.eq.s32.totalorder %s14, 0
      %p55 = por %p53, %p54
      %p56 = scmp.ne.s32.totalorder %s48, %s50
      %p57 = scmp.eq.s32.totalorder %s19, 1
      %p58 = por %p56, %p57
      %p59 = scmp.ne.s32.totalorder %s50, %s51
      %p60 = scmp.eq.s32.totalorder %s19, 0
      %p61 = por %p59, %p60
      %p62 = scmp.ne.s32.totalorder %s50, %s51
      %p63 = scmp.eq.s32.totalorder %s20, 1
      %p64 = por %p62, %p63
      %p66 = scmp.ne.s32.totalorder %s51, %s65
      %p67 = scmp.eq.s32.totalorder %s20, 0
      %p68 = por %p66, %p67
      %s70 = sadd.s32 %s69, 1
      %p73 = scmp.eq.s32.totalorder %s14, 1
      %p74 = scmp.ne.s32.totalorder %s69, %s71
      %p75 = scmp.eq.s32.totalorder %s14, 0
      %p76 = por %p74, %p75
      %p77 = scmp.ne.s32.totalorder %s69, %s71
      %p78 = scmp.eq.s32.totalorder %s19, 1
      %p79 = por %p77, %p78
      %p80 = scmp.ne.s32.totalorder %s71, %s72
      %p81 = scmp.eq.s32.totalorder %s19, 0
      %p82 = por %p80, %p81
      %p83 = scmp.ne.s32.totalorder %s71, %s72
      %p84 = scmp.eq.s32.totalorder %s20, 1
      %p85 = por %p83, %p84
      %p87 = scmp.ne.s32.totalorder %s72, %s86
      %p88 = scmp.eq.s32.totalorder %s20, 0
      %p89 = por %p87, %p88
      %s91 = sadd.s32 %s90, 1
      %p94 = scmp.eq.s32.totalorder %s14, 1
      %p95 = scmp.ne.s32.totalorder %s90, %s92
      %p96 = scmp.eq.s32.totalorder %s14, 0
      %p97 = por %p95, %p96
      %p98 = scmp.ne.s32.totalorder %s90, %s92
      %p99 = scmp.eq.s32.totalorder %s19, 1
      %p100 = por %p98, %p99
      %p101 = scmp.ne.s32.totalorder %s92, %s93
      %p102 = scmp.eq.s32.totalorder %s19, 0
      %p103 = por %p101, %p102
      %p104 = scmp.ne.s32.totalorder %s92, %s93
      %p105 = scmp.eq.s32.totalorder %s20, 1
      %p106 = por %p104, %p105
      %p108 = scmp.ne.s32.totalorder %s93, %s107
      %p109 = scmp.eq.s32.totalorder %s20, 0
      %p110 = por %p108, %p109
      %s112 = sadd.s32 %s111, 1
      %p115 = scmp.eq.s32.totalorder %s14, 1
      %p116 = scmp.ne.s32.totalorder %s111, %s113
      %p117 = scmp.eq.s32.totalorder %s14, 0
      %p118 = por %p116, %p117
      %p119 = scmp.ne.s32.totalorder %s111, %s113
      %p120 = scmp.eq.s32.totalorder %s19, 1
      %p121 = por %p119, %p120
      %p122 = scmp.ne.s32.totalorder %s113, %s114
      %p123 = scmp.eq.s32.totalorder %s19, 0
      %p124 = por %p122, %p123
      %p125 = scmp.ne.s32.totalorder %s113, %s114
      %p126 = scmp.eq.s32.totalorder %s20, 1
      %p127 = por %p125, %p126
      %p129 = scmp.ne.s32.totalorder %s114, %s128
      %p130 = scmp.eq.s32.totalorder %s20, 0
      %p131 = por %p129, %p130
      %s132 = ssub.s32 %s14, %s21
      %p133 = scmp.eq.s32.totalorder %s132, 0
      %s135 = sadd.s32 %s134, 1
      %s136 = scalar_select %p133, %s134, %s135
      %p139 = pneg %p133
      %p140 = scmp.eq.s32.totalorder %s14, 1
      %p141 = por %p139, %p140
      %p142 = scmp.ne.s32.totalorder %s134, %s137
      %p143 = scmp.eq.s32.totalorder %s14, 0
      %p144 = por %p142, %p143
      %p145 = scmp.ne.s32.totalorder %s134, %s137
      %p146 = scmp.eq.s32.totalorder %s19, 1
      %p147 = por %p145, %p146
      %p148 = scmp.ne.s32.totalorder %s137, %s138
      %p149 = scmp.eq.s32.totalorder %s19, 0
      %p150 = por %p148, %p149
      %p151 = scmp.ne.s32.totalorder %s137, %s138
      %p152 = scmp.eq.s32.totalorder %s20, 1
      %p153 = por %p151, %p152
      %p155 = scmp.ne.s32.totalorder %s138, %s154
      %p156 = scmp.eq.s32.totalorder %s20, 0
      %p157 = por %p155, %p156
      %p158 = scmp.le.s32.totalorder 1, %s14
      %p159 = scmp.lt.s32.totalorder %s14, 3
      %p160 = pnand %p158, %p159
      %p161 = pneg %p160
      // Predicated region
      $region9: #{tpu_custom_call.1} parent=5 // pred_check
        _
      $region10: #{tpu_custom_call.1} parent=5 // pred_check_branch
        %163 = sbr.rel (%p160) target = $region12
      $region11: #{tpu_custom_call.1} parent=5 // pred_region
        %s164 = ssub.s32 %s14, 1
        // Predicated region
        $region13: #{tpu_custom_call.1} parent=11 // pred_check
          %p165 = pneg %p61
        $region14: #{tpu_custom_call.1} parent=11 // pred_check_branch
          %167 = sbr.rel (%p165) target = $region16
        $region15: #{tpu_custom_call.1} parent=11 // pred_region
          _
        $region16: #{tpu_custom_call.1} parent=11 // pred_fallthru
          _
        // Predicated region
        $region17: #{tpu_custom_call.1} parent=11 // pred_check
          %p168 = pneg %p82
        $region18: #{tpu_custom_call.1} parent=11 // pred_check_branch
          %170 = sbr.rel (%p168) target = $region20
        $region19: #{tpu_custom_call.1} parent=11 // pred_region
          _
        $region20: #{tpu_custom_call.1} parent=11 // pred_fallthru
          _
        // Predicated region
        $region21: #{tpu_custom_call.1} parent=11 // pred_check
          %p171 = pneg %p103
        $region22: #{tpu_custom_call.1} parent=11 // pred_check_branch
          %173 = sbr.rel (%p171) target = $region24
        $region23: #{tpu_custom_call.1} parent=11 // pred_region
          _
        $region24: #{tpu_custom_call.1} parent=11 // pred_fallthru
          _
        // Predicated region
        $region25: #{tpu_custom_call.1} parent=11 // pred_check
          %p174 = pneg %p124
        $region26: #{tpu_custom_call.1} parent=11 // pred_check_branch
          %176 = sbr.rel (%p174) target = $region28
        $region27: #{tpu_custom_call.1} parent=11 // pred_region
          _
        $region28: #{tpu_custom_call.1} parent=11 // pred_fallthru
          _
      $region12: #{tpu_custom_call.1} parent=5 // pred_fallthru
        _
      %p177 = scmp.lt.s32.totalorder %s14, 2
      // Predicated region
      $region29: #{tpu_custom_call.1} parent=5 // pred_check
        %p178 = pneg %p177
      $region30: #{tpu_custom_call.1} parent=5 // pred_check_branch
        %180 = sbr.rel (%p178) target = $region32
      $region31: #{tpu_custom_call.1} parent=5 // pred_region
        // Predicated region
        $region33: #{tpu_custom_call.1} parent=31 // pred_check
          %p181 = pneg %p34
        $region34: #{tpu_custom_call.1} parent=31 // pred_check_branch
          %183 = sbr.rel (%p181) target = $region36
        $region35: #{tpu_custom_call.1} parent=31 // pred_region
          %s184 = smul.u32 16, %s14
          %p185 = scmp.lt.s32.totalorder %s184, 31
          %s186 = scalar_select %p185, %s184, 31
          %s187 = smul.addr %s186, 4
          %s188 = scalar_lea.vmem %s0, %s187
          %s189 = smul.u32 16, %s14
        $region36: #{tpu_custom_call.1} parent=31 // pred_fallthru
          _
      $region32: #{tpu_custom_call.1} parent=5 // pred_fallthru
        _
      %p190 = scmp.le.s32.totalorder 1, %s14
      %p191 = scmp.lt.s32.totalorder %s14, 3
      %p192 = pnand %p190, %p191
      %p193 = pneg %p192
      // Predicated region
      $region37: #{tpu_custom_call.1} parent=5 // pred_check
        _
      $region38: #{tpu_custom_call.1} parent=5 // pred_check_branch
        %195 = sbr.rel (%p192) target = $region40
      $region39: #{tpu_custom_call.1} parent=5 // pred_region
        %s196 = ssub.s32 %s14, 1
        %s197 = smul.u32 16, %s19
        %p198 = scmp.lt.s32.totalorder %s197, 31
        %s199 = scalar_select %p198, %s197, 31
        %s200 = smul.addr %s199, 4
        %s201 = scalar_lea.vmem %s0, %s200
        %p202 = pneg %p40
        %p203 = pneg %p37
        %p204 = pneg %p61
        %p205 = pneg %p58
        %p206 = pneg %p82
        %p207 = pneg %p79
        %p208 = pneg %p103
        %p209 = pneg %p100
        %p210 = pneg %p124
        %p211 = pneg %p121
        %p212 = pneg %p150
        %p213 = pneg %p147
        %s214 = sand.u32 %s137, 1
        %s215 = scalar_lea.sflag [#allocation3], %s214
        %s216 = sand.u32 %s137, 1
        %s217 = smul.addr %s216, 128
        %s218 = scalar_lea.vmem [#allocation2], %s217
        %s219 = smul.u32 16, %s19
        %p220 = scmp.lt.s32.totalorder %s219, 31
        %s221 = scalar_select %p220, %s219, 31
        %s222 = smul.addr %s221, 4
        %s223 = scalar_lea.vmem %s0, %s222
        %s224 = smul.u32 16, %s19
        %s225 = smul.u32 16, %s19
        %v227 = vld [vmem:[%s223] sm:$0xf]
        %v228 = vld [vmem:[%s223 + $0x4] sm:$0xf]
        %v229 = vld [vmem:[%s223 + $0x8] sm:$0xf]
        %v230 = vld [vmem:[%s223 + $0xc] sm:$0xf]
        %v231 = vld [vmem:[%s223 + $0x10] sm:$0xf]
        %v232 = vld [vmem:[%s223 + $0x14] sm:$0xf]
        %v233 = vld [vmem:[%s223 + $0x18] sm:$0xf]
        %v234 = vld [vmem:[%s223 + $0x1c] sm:$0xf]
        %v235 = vld [vmem:[%s223 + $0x20] sm:$0xf]
        %v236 = vld [vmem:[%s223 + $0x24] sm:$0xf]
        %v237 = vld [vmem:[%s223 + $0x28] sm:$0xf]
        %v238 = vld [vmem:[%s223 + $0x2c] sm:$0xf]
        %v239 = vld [vmem:[%s223 + $0x30] sm:$0xf]
        %v240 = vld [vmem:[%s223 + $0x34] sm:$0xf]
        %v241 = vld [vmem:[%s223 + $0x38] sm:$0xf]
        %v242 = vld [vmem:[%s223 + $0x3c] sm:$0xf]
        %v243 = vld [vmem:[%s1] sm:$0xf]
        %v244 = vld [vmem:[%s1 + $0x4] sm:$0xf]
        %v245 = vld [vmem:[%s1 + $0x8] sm:$0xf]
        %v246 = vld [vmem:[%s1 + $0xc] sm:$0xf]
        %v247 = vld [vmem:[%s4] sm:$0x1]
        %v248 = vperm.slane %v247, 0
        %v265 = vunpack.c.l.b16 %v227
        %v266 = vunpack.c.l.b16 %v228
        %v267 = vunpack.c.l.b16 %v229
        %v268 = vunpack.c.l.b16 %v230
        %v269 = vunpack.c.l.b16 %v231
        %v270 = vunpack.c.l.b16 %v232
        %v271 = vunpack.c.l.b16 %v233
        %v272 = vunpack.c.l.b16 %v234
        %v273 = vunpack.c.l.b16 %v235
        %v274 = vunpack.c.l.b16 %v236
        %v275 = vunpack.c.l.b16 %v237
        %v276 = vunpack.c.l.b16 %v238
        %v277 = vunpack.c.l.b16 %v239
        %v278 = vunpack.c.l.b16 %v240
        %v279 = vunpack.c.l.b16 %v241
        %v280 = vunpack.c.l.b16 %v242
        %v281 = vpack.c.b16 %v266, %v265
        %v282 = vpack.c.b16 %v268, %v267
        %v283 = vpack.c.b16 %v270, %v269
        %v284 = vpack.c.b16 %v272, %v271
        %v285 = vpack.c.b16 %v274, %v273
        %v286 = vpack.c.b16 %v276, %v275
        %v287 = vpack.c.b16 %v278, %v277
        %v288 = vpack.c.b16 %v280, %v279
        %v293 = vunpack.c.l.b16 %v243
        %v294 = vunpack.c.l.b16 %v244
        %v295 = vunpack.c.l.b16 %v245
        %v296 = vunpack.c.l.b16 %v246
        %v297 = vpack.c.b16 %v294, %v293
        %v298 = vpack.c.b16 %v296, %v295
        %vm301 = vcmask 261120
        %v303 = vsel %vm301, %v281, 0
        %v306 = vsel %vm301, %v282, 0
        %v309 = vsel %vm301, %v283, 0
        %v312 = vsel %vm301, %v284, 0
        %v315 = vsel %vm301, %v285, 0
        %v318 = vsel %vm301, %v286, 0
        %v321 = vsel %vm301, %v287, 0
        %v324 = vsel %vm301, %v288, 0
        %326 = vmatpush.bf16.msra.mxu0 0
        %327 = vmatpush.bf16.msra.mxu0 0
        %328 = vmatpush.bf16.msra.mxu0 0
        %329 = vmatpush.bf16.msra.mxu0 0
        %330 = vmatpush.bf16.msra.mxu0 0
        %331 = vmatpush.bf16.msra.mxu0 0
        %332 = vmatpush.bf16.msra.mxu0 %v298
        %333 = vmatpush.bf16.msra.mxu0 %v297
        %334 = vmatmul.bf16.gmra.mxu0 %v303
        %v335 = vpop.f32.mrf.mxu0
        %v336 = vadd.f32 %v248, %v335
        %v337 = vpop.f32.mrf.mxu0
        %v338 = vadd.f32 %v248, %v337
        %339 = vmatmul.bf16.gmra.mxu0 %v306
        %v340 = vpop.f32.mrf.mxu0
        %v341 = vadd.f32 %v248, %v340
        %v342 = vpop.f32.mrf.mxu0
        %v343 = vadd.f32 %v248, %v342
        %344 = vmatmul.bf16.gmra.mxu0 %v309
        %v345 = vpop.f32.mrf.mxu0
        %v346 = vadd.f32 %v248, %v345
        %v347 = vpop.f32.mrf.mxu0
        %v348 = vadd.f32 %v248, %v347
        %349 = vmatmul.bf16.gmra.mxu0 %v312
        %v350 = vpop.f32.mrf.mxu0
        %v351 = vadd.f32 %v248, %v350
        %v352 = vpop.f32.mrf.mxu0
        %v353 = vadd.f32 %v248, %v352
        %354 = vmatmul.bf16.gmra.mxu0 %v315
        %v355 = vpop.f32.mrf.mxu0
        %v356 = vadd.f32 %v248, %v355
        %v357 = vpop.f32.mrf.mxu0
        %v358 = vadd.f32 %v248, %v357
        %359 = vmatmul.bf16.gmra.mxu0 %v318
        %v360 = vpop.f32.mrf.mxu0
        %v361 = vadd.f32 %v248, %v360
        %v362 = vpop.f32.mrf.mxu0
        %v363 = vadd.f32 %v248, %v362
        %364 = vmatmul.bf16.gmra.mxu0 %v321
        %v365 = vpop.f32.mrf.mxu0
        %v366 = vadd.f32 %v248, %v365
        %v367 = vpop.f32.mrf.mxu0
        %v368 = vadd.f32 %v248, %v367
        %369 = vmatmul.bf16.gmra.mxu0 %v324
        %v370 = vpop.f32.mrf.mxu0
        %v371 = vadd.f32 %v248, %v370
        %v372 = vpop.f32.mrf.mxu0
        %v373 = vadd.f32 %v248, %v372
        %374 = vdwg.mxu0
        %v375 = vmax.f32 %v336, 0.0
        %v376 = vmax.f32 %v338, 0.0
        %v377 = vmax.f32 %v341, 0.0
        %v378 = vmax.f32 %v343, 0.0
        %v379 = vmax.f32 %v346, 0.0
        %v380 = vmax.f32 %v348, 0.0
        %v381 = vmax.f32 %v351, 0.0
        %v382 = vmax.f32 %v353, 0.0
        %v383 = vmax.f32 %v356, 0.0
        %v384 = vmax.f32 %v358, 0.0
        %v385 = vmax.f32 %v361, 0.0
        %v386 = vmax.f32 %v363, 0.0
        %v387 = vmax.f32 %v366, 0.0
        %v388 = vmax.f32 %v368, 0.0
        %v389 = vmax.f32 %v371, 0.0
        %v390 = vmax.f32 %v373, 0.0
        %v391 = vpack.c.bf16 %v376, %v375
        %v392 = vpack.c.bf16 %v378, %v377
        %v393 = vpack.c.bf16 %v380, %v379
        %v394 = vpack.c.bf16 %v382, %v381
        %v395 = vpack.c.bf16 %v384, %v383
        %v396 = vpack.c.bf16 %v386, %v385
        %v397 = vpack.c.bf16 %v388, %v387
        %v398 = vpack.c.bf16 %v390, %v389
        %v399 = vld [vmem:[%s2] sm:$0xf]
        %v400 = vld [vmem:[%s2 + $0x4] sm:$0xf]
        %v401 = vld [vmem:[%s2 + $0x8] sm:$0xf]
        %v402 = vld [vmem:[%s2 + $0xc] sm:$0xf]
        %v403 = vld [vmem:[%s2 + $0x10] sm:$0xf]
        %v404 = vld [vmem:[%s2 + $0x14] sm:$0xf]
        %v405 = vld [vmem:[%s2 + $0x18] sm:$0xf]
        %v406 = vld [vmem:[%s2 + $0x1c] sm:$0xf]
        %v407 = vld [vmem:[%s2 + $0x20] sm:$0xf]
        %v408 = vld [vmem:[%s2 + $0x24] sm:$0xf]
        %v409 = vld [vmem:[%s2 + $0x28] sm:$0xf]
        %v410 = vld [vmem:[%s2 + $0x2c] sm:$0xf]
        %v411 = vld [vmem:[%s2 + $0x30] sm:$0xf]
        %v412 = vld [vmem:[%s2 + $0x34] sm:$0xf]
        %v413 = vld [vmem:[%s2 + $0x38] sm:$0xf]
        %v414 = vld [vmem:[%s2 + $0x3c] sm:$0xf]
        %v415 = vld [vmem:[%s4 + $0x1] sm:$0x1]
        %v416 = vperm.slane %v415, 0
        %v433 = vunpack.c.l.b16 %v399
        %v434 = vunpack.c.l.b16 %v400
        %v435 = vunpack.c.l.b16 %v401
        %v436 = vunpack.c.l.b16 %v402
        %v437 = vunpack.c.l.b16 %v403
        %v438 = vunpack.c.l.b16 %v404
        %v439 = vunpack.c.l.b16 %v405
        %v440 = vunpack.c.l.b16 %v406
        %v441 = vunpack.c.l.b16 %v407
        %v442 = vunpack.c.l.b16 %v408
        %v443 = vunpack.c.l.b16 %v409
        %v444 = vunpack.c.l.b16 %v410
        %v445 = vunpack.c.l.b16 %v411
        %v446 = vunpack.c.l.b16 %v412
        %v447 = vunpack.c.l.b16 %v413
        %v448 = vunpack.c.l.b16 %v414
        %v449 = vpack.c.b16 %v434, %v433
        %v450 = vpack.c.b16 %v436, %v435
        %v451 = vpack.c.b16 %v438, %v437
        %v452 = vpack.c.b16 %v440, %v439
        %v453 = vpack.c.b16 %v442, %v441
        %v454 = vpack.c.b16 %v444, %v443
        %v455 = vpack.c.b16 %v446, %v445
        %v456 = vpack.c.b16 %v448, %v447
        %465 = vmatpush.bf16.msra.mxu0 %v456
        %466 = vmatpush.bf16.msra.mxu0 %v455
        %467 = vmatpush.bf16.msra.mxu0 %v454
        %468 = vmatpush.bf16.msra.mxu0 %v453
        %469 = vmatpush.bf16.msra.mxu0 %v452
        %470 = vmatpush.bf16.msra.mxu0 %v451
        %471 = vmatpush.bf16.msra.mxu0 %v450
        %472 = vmatpush.bf16.msra.mxu0 %v449
        %473 = vmatmul.bf16.gmra.mxu0 %v391
        %v474 = vpop.f32.mrf.mxu0
        %v475 = vadd.f32 %v416, %v474
        %v476 = vpop.f32.mrf.mxu0
        %v477 = vadd.f32 %v416, %v476
        %478 = vmatmul.bf16.gmra.mxu0 %v392
        %v479 = vpop.f32.mrf.mxu0
        %v480 = vadd.f32 %v416, %v479
        %v481 = vpop.f32.mrf.mxu0
        %v482 = vadd.f32 %v416, %v481
        %483 = vmatmul.bf16.gmra.mxu0 %v393
        %v484 = vpop.f32.mrf.mxu0
        %v485 = vadd.f32 %v416, %v484
        %v486 = vpop.f32.mrf.mxu0
        %v487 = vadd.f32 %v416, %v486
        %488 = vmatmul.bf16.gmra.mxu0 %v394
        %v489 = vpop.f32.mrf.mxu0
        %v490 = vadd.f32 %v416, %v489
        %v491 = vpop.f32.mrf.mxu0
        %v492 = vadd.f32 %v416, %v491
        %493 = vmatmul.bf16.gmra.mxu0 %v395
        %v494 = vpop.f32.mrf.mxu0
        %v495 = vadd.f32 %v416, %v494
        %v496 = vpop.f32.mrf.mxu0
        %v497 = vadd.f32 %v416, %v496
        %498 = vmatmul.bf16.gmra.mxu0 %v396
        %v499 = vpop.f32.mrf.mxu0
        %v500 = vadd.f32 %v416, %v499
        %v501 = vpop.f32.mrf.mxu0
        %v502 = vadd.f32 %v416, %v501
        %503 = vmatmul.bf16.gmra.mxu0 %v397
        %v504 = vpop.f32.mrf.mxu0
        %v505 = vadd.f32 %v416, %v504
        %v506 = vpop.f32.mrf.mxu0
        %v507 = vadd.f32 %v416, %v506
        %508 = vmatmul.bf16.gmra.mxu0 %v398
        %v509 = vpop.f32.mrf.mxu0
        %v510 = vadd.f32 %v416, %v509
        %v511 = vpop.f32.mrf.mxu0
        %v512 = vadd.f32 %v416, %v511
        %513 = vdwg.mxu0
        %v514 = vmax.f32 %v475, 0.0
        %v515 = vmax.f32 %v477, 0.0
        %v516 = vmax.f32 %v480, 0.0
        %v517 = vmax.f32 %v482, 0.0
        %v518 = vmax.f32 %v485, 0.0
        %v519 = vmax.f32 %v487, 0.0
        %v520 = vmax.f32 %v490, 0.0
        %v521 = vmax.f32 %v492, 0.0
        %v522 = vmax.f32 %v495, 0.0
        %v523 = vmax.f32 %v497, 0.0
        %v524 = vmax.f32 %v500, 0.0
        %v525 = vmax.f32 %v502, 0.0
        %v526 = vmax.f32 %v505, 0.0
        %v527 = vmax.f32 %v507, 0.0
        %v528 = vmax.f32 %v510, 0.0
        %v529 = vmax.f32 %v512, 0.0
        %v530 = vpack.c.bf16 %v515, %v514
        %v531 = vpack.c.bf16 %v517, %v516
        %v532 = vpack.c.bf16 %v519, %v518
        %v533 = vpack.c.bf16 %v521, %v520
        %v534 = vpack.c.bf16 %v523, %v522
        %v535 = vpack.c.bf16 %v525, %v524
        %v536 = vpack.c.bf16 %v527, %v526
        %v537 = vpack.c.bf16 %v529, %v528
        %v538 = vld [vmem:[%s3] sm:$0xf]
        %v539 = vld [vmem:[%s3 + $0x4] sm:$0xf]
        %v540 = vld [vmem:[%s3 + $0x8] sm:$0xf]
        %v541 = vld [vmem:[%s3 + $0xc] sm:$0xf]
        %v542 = vld [vmem:[%s3 + $0x10] sm:$0xf]
        %v543 = vld [vmem:[%s3 + $0x14] sm:$0xf]
        %v544 = vld [vmem:[%s3 + $0x18] sm:$0xf]
        %v545 = vld [vmem:[%s3 + $0x1c] sm:$0xf]
        %v546 = vld [vmem:[%s3 + $0x20] sm:$0xf]
        %v547 = vld [vmem:[%s3 + $0x24] sm:$0xf]
        %v548 = vld [vmem:[%s3 + $0x28] sm:$0xf]
        %v549 = vld [vmem:[%s3 + $0x2c] sm:$0xf]
        %v550 = vld [vmem:[%s3 + $0x30] sm:$0xf]
        %v551 = vld [vmem:[%s3 + $0x34] sm:$0xf]
        %v552 = vld [vmem:[%s3 + $0x38] sm:$0xf]
        %v553 = vld [vmem:[%s3 + $0x3c] sm:$0xf]
        %v554 = vld [vmem:[%s4 + $0x2] sm:$0x1]
        %v555 = vperm.slane %v554, 0
        %v572 = vunpack.c.l.b16 %v538
        %v573 = vunpack.c.l.b16 %v539
        %v574 = vunpack.c.l.b16 %v540
        %v575 = vunpack.c.l.b16 %v541
        %v576 = vunpack.c.l.b16 %v542
        %v577 = vunpack.c.l.b16 %v543
        %v578 = vunpack.c.l.b16 %v544
        %v579 = vunpack.c.l.b16 %v545
        %v580 = vunpack.c.l.b16 %v546
        %v581 = vunpack.c.l.b16 %v547
        %v582 = vunpack.c.l.b16 %v548
        %v583 = vunpack.c.l.b16 %v549
        %v584 = vunpack.c.l.b16 %v550
        %v585 = vunpack.c.l.b16 %v551
        %v586 = vunpack.c.l.b16 %v552
        %v587 = vunpack.c.l.b16 %v553
        %v588 = vpack.c.b16 %v573, %v572
        %v589 = vpack.c.b16 %v575, %v574
        %v590 = vpack.c.b16 %v577, %v576
        %v591 = vpack.c.b16 %v579, %v578
        %v592 = vpack.c.b16 %v581, %v580
        %v593 = vpack.c.b16 %v583, %v582
        %v594 = vpack.c.b16 %v585, %v584
        %v595 = vpack.c.b16 %v587, %v586
        %604 = vmatpush.bf16.msra.mxu0 %v595
        %605 = vmatpush.bf16.msra.mxu0 %v594
        %606 = vmatpush.bf16.msra.mxu0 %v593
        %607 = vmatpush.bf16.msra.mxu0 %v592
        %608 = vmatpush.bf16.msra.mxu0 %v591
        %609 = vmatpush.bf16.msra.mxu0 %v590
        %610 = vmatpush.bf16.msra.mxu0 %v589
        %611 = vmatpush.bf16.msra.mxu0 %v588
        %612 = vmatmul.bf16.gmra.mxu0 %v530
        %v613 = vpop.f32.mrf.mxu0
        %v614 = vadd.f32 %v555, %v613
        %v615 = vpop.f32.mrf.mxu0
        %v616 = vadd.f32 %v555, %v615
        %617 = vmatmul.bf16.gmra.mxu0 %v531
        %v618 = vpop.f32.mrf.mxu0
        %v619 = vadd.f32 %v555, %v618
        %v620 = vpop.f32.mrf.mxu0
        %v621 = vadd.f32 %v555, %v620
        %622 = vmatmul.bf16.gmra.mxu0 %v532
        %v623 = vpop.f32.mrf.mxu0
        %v624 = vadd.f32 %v555, %v623
        %v625 = vpop.f32.mrf.mxu0
        %v626 = vadd.f32 %v555, %v625
        %627 = vmatmul.bf16.gmra.mxu0 %v533
        %v628 = vpop.f32.mrf.mxu0
        %v629 = vadd.f32 %v555, %v628
        %v630 = vpop.f32.mrf.mxu0
        %v631 = vadd.f32 %v555, %v630
        %632 = vmatmul.bf16.gmra.mxu0 %v534
        %v633 = vpop.f32.mrf.mxu0
        %v634 = vadd.f32 %v555, %v633
        %v635 = vpop.f32.mrf.mxu0
        %v636 = vadd.f32 %v555, %v635
        %637 = vmatmul.bf16.gmra.mxu0 %v535
        %v638 = vpop.f32.mrf.mxu0
        %v639 = vadd.f32 %v555, %v638
        %v640 = vpop.f32.mrf.mxu0
        %v641 = vadd.f32 %v555, %v640
        %642 = vmatmul.bf16.gmra.mxu0 %v536
        %v643 = vpop.f32.mrf.mxu0
        %v644 = vadd.f32 %v555, %v643
        %v645 = vpop.f32.mrf.mxu0
        %v646 = vadd.f32 %v555, %v645
        %647 = vmatmul.bf16.gmra.mxu0 %v537
        %v648 = vpop.f32.mrf.mxu0
        %v649 = vadd.f32 %v555, %v648
        %v650 = vpop.f32.mrf.mxu0
        %v651 = vadd.f32 %v555, %v650
        %652 = vdwg.mxu0
        %653 = vst [vmem:[%s218] sm:$0xff] %v614
        %654 = vst [vmem:[%s218 + $0x8] sm:$0xff] %v616
        %655 = vst [vmem:[%s218 + $0x10] sm:$0xff] %v619
        %656 = vst [vmem:[%s218 + $0x18] sm:$0xff] %v621
        %657 = vst [vmem:[%s218 + $0x20] sm:$0xff] %v624
        %658 = vst [vmem:[%s218 + $0x28] sm:$0xff] %v626
        %659 = vst [vmem:[%s218 + $0x30] sm:$0xff] %v629
        %660 = vst [vmem:[%s218 + $0x38] sm:$0xff] %v631
        %661 = vst [vmem:[%s218 + $0x40] sm:$0xff] %v634
        %662 = vst [vmem:[%s218 + $0x48] sm:$0xff] %v636
        %663 = vst [vmem:[%s218 + $0x50] sm:$0xff] %v639
        %664 = vst [vmem:[%s218 + $0x58] sm:$0xff] %v641
        %665 = vst [vmem:[%s218 + $0x60] sm:$0xff] %v644
        %666 = vst [vmem:[%s218 + $0x68] sm:$0xff] %v646
        %667 = vst [vmem:[%s218 + $0x70] sm:$0xff] %v649
        %668 = vst [vmem:[%s218 + $0x78] sm:$0xff] %v651
        %s669 = sand.u32 %s137, 1
        %s670 = scalar_lea.sflag [#allocation3], %s669
        %s671 = sand.u32 %s137, 1
        %s672 = smul.addr %s671, 128
        %s673 = scalar_lea.vmem [#allocation2], %s672
        // Predicated region
        $region41: #{tpu_custom_call.1} parent=39 // pred_check
          %p674 = pneg %p147
        $region42: #{tpu_custom_call.1} parent=39 // pred_check_branch
          %676 = sbr.rel (%p674) target = $region44
        $region43: #{tpu_custom_call.1} parent=39 // pred_region
          %s677 = smul.u32 16, %s19
          %679 = vsyncadd %s670, 0
          %s680 = smul.addr %s677, 8
          %s681 = scalar_lea.hbm %s5, %s680
          %s682 = sshll.u32 %s673, 4
          %s683 = int_to_ptr.vmem [resolvable:$true] %s682
          %s684 = sshll.u32 %s681, 4
          %s685 = int_to_ptr.hbm [resolvable:$true] %s684
          %690 = dma.vmem_to_hbm [thread:$0]  %s683, 2048, %s685, %s670, 128, 128, 8
        $region44: #{tpu_custom_call.1} parent=39 // pred_fallthru
          _
      $region40: #{tpu_custom_call.1} parent=5 // pred_fallthru
        _
      %p691 = scmp.le.s32.totalorder 2, %s14
      // Predicated region
      $region45: #{tpu_custom_call.1} parent=5 // pred_check
        %p692 = pneg %p691
      $region46: #{tpu_custom_call.1} parent=5 // pred_check_branch
        %694 = sbr.rel (%p692) target = $region48
      $region47: #{tpu_custom_call.1} parent=5 // pred_region
        %s695 = ssub.s32 %s14, 2
        // Predicated region
        $region49: #{tpu_custom_call.1} parent=47 // pred_check
          %p696 = pneg %p153
        $region50: #{tpu_custom_call.1} parent=47 // pred_check_branch
          %698 = sbr.rel (%p696) target = $region52
        $region51: #{tpu_custom_call.1} parent=47 // pred_region
          %s699 = sand.u32 %s138, 1
          %s700 = scalar_lea.sflag [#allocation3], %s699
          %s701 = sand.u32 %s138, 1
          %s702 = smul.addr %s701, 128
          %s703 = scalar_lea.vmem [#allocation2], %s702
          %705 = dma.done %s700, 2048
        $region52: #{tpu_custom_call.1} parent=47 // pred_fallthru
          _
      $region48: #{tpu_custom_call.1} parent=5 // pred_fallthru
        _
    $region6: #{tpu_custom_call.1} parent=1 // loop_footer
      %s18 = sadd.s32 1, %s14
    $region7: #{tpu_custom_call.1} parent=1 // loop_footer_branch
      %13 = sbr.rel target = $region3
    $region8: #{tpu_custom_call.1} parent=1 // loop_exit
      _
    %706 = vsyncpa [#allocation3], 1
    %s707 = scalar_lea.sflag [#allocation3], 1
    %708 = vsyncpa %s707, 1

</llo_original>
